<compile_context>
chip_gen: v7x
topology: tpu7x:2x2x1
jax: 0.10.0
libtpu: 0.0.40
codegen_flags: <defaults>
</compile_context>

<pallas_src>
import functools

import jax
import jax.numpy as jnp
from jax.experimental import pallas as pl
from jax.experimental.pallas import tpu as pltpu


def _tblock_kernel(xq_ref, xkv_ref,
                   wq_ref, bq_ref, wkv_ref, bkv_ref, wo_ref, bo_ref,
                   w1_ref, b1_ref, w2_ref, b2_ref,
                   g1_ref, beta1_ref, g2_ref, beta2_ref,
                   o_ref, ctx_ref, *, n_heads, eps):
    xq = xq_ref[0].astype(jnp.float32)                    # (TQ, D) query rows
    TQ, D = xq.shape
    dh = D // n_heads

    xq_b = xq.astype(jnp.bfloat16)
    xkv_b = xkv_ref[0].astype(jnp.bfloat16)               # (S, D) full sequence

    # ---- projections (weights pre-transposed; 1/sqrt(dh) folded into Q) ----
    q = (jnp.dot(xq_b, wq_ref[...], preferred_element_type=jnp.float32)
         + bq_ref[...]).astype(jnp.bfloat16)                          # (TQ, D)
    kv = (jnp.dot(xkv_b, wkv_ref[...], preferred_element_type=jnp.float32)
          + bkv_ref[...])                                             # (S, 2D)
    k = kv[:, :D].astype(jnp.bfloat16)                                # (S, D)
    v = kv[:, D:].astype(jnp.bfloat16)                                # (S, D)

    # ---- per-head attention into a single bf16 context buffer --------------
    # Each head's (TQ, dh) context lands in lanes [h*dh, (h+1)*dh) of ctx_ref,
    # so the output projection below is ONE full-depth (K = D) matmul.
    # Per-head temporaries feed only a ref store, so nothing stays live across
    # heads.  TODO(synk): for very long S switch this static unroll to a
    # fori_loop / head grid axis so Mosaic provably keeps one (TQ, S) score
    # matrix live at a time.
    for h in range(n_heads):
        lo, hi = h * dh, (h + 1) * dh
        s = jax.lax.dot_general(q[:, lo:hi], k[:, lo:hi],
                                (((1,), (1,)), ((), ())),
                                preferred_element_type=jnp.float32)   # (TQ, S)
        s = s - jnp.max(s, axis=-1, keepdims=True)
        p = jnp.exp(s)
        p = p * pl.reciprocal(jnp.sum(p, axis=-1, keepdims=True), approx=True)
        ctx_ref[:, lo:hi] = jnp.dot(
            p.astype(jnp.bfloat16), v[:, lo:hi],
            preferred_element_type=jnp.float32).astype(jnp.bfloat16)

    # Single output projection over the concatenated heads (K = D contraction).
    attn = jnp.dot(ctx_ref[...], wo_ref[...],
                   preferred_element_type=jnp.float32) + bo_ref[...]  # (TQ, D)

    # ---- residual + LayerNorm 1 (f32) ----
    h1 = xq + attn
    mu = jnp.mean(h1, axis=-1, keepdims=True)
    var = jnp.mean((h1 - mu) ** 2, axis=-1, keepdims=True)
    h1 = (h1 - mu) * (jax.lax.rsqrt(var + eps) * g1_ref[...]) + beta1_ref[...]
    h1_b = h1.astype(jnp.bfloat16)

    # ---- MLP tiled over d_mlp: linear2(relu(linear1(h1))) ------------------
    # Each d_mlp tile of linear1 is consumed immediately as a K-tile of
    # linear2; only one (TQ, TM) activation tile is live at a time.
    n_mlp_tiles = w1_ref.shape[0]

    def mlp_tile(j, acc):
        a = (jnp.dot(h1_b, w1_ref[j], preferred_element_type=jnp.float32)
             + b1_ref[j])                                             # (TQ, TM)
        a = jnp.maximum(a, 0.0).astype(jnp.bfloat16)
        return acc + jnp.dot(a, w2_ref[j], preferred_element_type=jnp.float32)

    ff0 = jnp.broadcast_to(b2_ref[...], (TQ, D)).astype(jnp.float32)
    ff = jax.lax.fori_loop(0, n_mlp_tiles, mlp_tile, ff0)

    # ---- residual + LayerNorm 2 (f32) ----
    h2 = h1 + ff
    mu2 = jnp.mean(h2, axis=-1, keepdims=True)
    var2 = jnp.mean((h2 - mu2) ** 2, axis=-1, keepdims=True)
    out = (h2 - mu2) * (jax.lax.rsqrt(var2 + eps) * g2_ref[...]) + beta2_ref[...]

    o_ref[0] = out.astype(o_ref.dtype)


def _pick_tile(total, cap, align):
    """Largest divisor of `total` that is <= cap and a multiple of `align`."""
    if total <= cap:
        return total
    for t in range(cap - cap % align, align - 1, -align):
        if total % t == 0:
            return t
    return total


def transformer_block(x_snd, params, n_heads):
    """x_snd: (S, N, D) like PyTorch (seq, batch, d_model), batch_first=False."""
    S, N, D = x_snd.shape
    d_mlp = params["w1"].shape[0]
    dh = D // n_heads
    scale = 1.0 / float(dh) ** 0.5

    x = jnp.transpose(x_snd, (1, 0, 2))                   # (N, S, D)

    # Tiling choices: query-row tile and d_mlp tile.
    TQ = _pick_tile(S, 256, 8)
    n_q_tiles = S // TQ
    TM = _pick_tile(d_mlp, 512, 128)
    n_mlp_tiles = d_mlp // TM

    # ---- one-time weight preparation (transpose, bf16, scale folding) ----
    wqkv = params["wqkv"].astype(jnp.float32)             # (3D, D)
    wq_t = (scale * wqkv[:D]).T.astype(jnp.bfloat16)      # (D, D)
    bq = (scale * params["bqkv"][:D]).reshape(1, D).astype(jnp.float32)
    wkv_t = wqkv[D:].T.astype(jnp.bfloat16)               # (D, 2D) -> [K | V]
    bkv = params["bqkv"][D:].reshape(1, 2 * D).astype(jnp.float32)
    wo_t = params["wo"].T.astype(jnp.bfloat16)            # (D, D)
    bo = params["bo"].reshape(1, D).astype(jnp.float32)

    # MLP weights split into d_mlp tiles along a LEADING dim so the kernel can
    # index tiles with a cheap leading-dim dynamic index inside fori_loop.
    w1_tiles = (params["w1"].T.reshape(D, n_mlp_tiles, TM)
                .transpose(1, 0, 2).astype(jnp.bfloat16))        # (T, D, TM)
    b1_tiles = params["b1"].reshape(n_mlp_tiles, 1, TM).astype(jnp.float32)
    w2_tiles = (params["w2"].T.reshape(n_mlp_tiles, TM, D)
                .astype(jnp.bfloat16))                           # (T, TM, D)
    b2 = params["b2"].reshape(1, D).astype(jnp.float32)

    g1 = params["g1"].reshape(1, D).astype(jnp.float32)
    beta1 = params["beta1"].reshape(1, D).astype(jnp.float32)
    g2 = params["g2"].reshape(1, D).astype(jnp.float32)
    beta2 = params["beta2"].reshape(1, D).astype(jnp.float32)

    consts = (wq_t, bq, wkv_t, bkv, wo_t, bo,
              w1_tiles, b1_tiles, w2_tiles, b2, g1, beta1, g2, beta2)

    # TODO(synk): single-buffer the constant-index weight blocks
    # (pipeline_mode=pl.Buffered(1)) once stable, to halve their VMEM footprint.
    def const_spec(a):
        nd = a.ndim
        return pl.BlockSpec(a.shape, lambda n, qi, _nd=nd: (0,) * _nd)

    # ---- generation-aware VMEM budget ----
    try:
        info = pltpu.get_tpu_info()
        vmem_cap = int(getattr(info, "vmem_capacity_bytes", 64 << 20))
    except Exception:
        vmem_cap = 64 << 20                                # conservative (v7x)
    itemsize_x = x.dtype.itemsize
    const_bytes = sum(int(a.size) * a.dtype.itemsize for a in consts)
    act_bytes = (
        2 * (TQ * D + S * D) * itemsize_x                  # xq + xkv blocks (2x)
        + 2 * TQ * D * itemsize_x                          # out block (2x)
        + TQ * D * 2                                       # bf16 ctx scratch
        + S * 2 * D * (4 + 2)                              # kv f32 + k/v bf16
        + TQ * D * (4 + 2 + 4 * 4)                         # q / h1 / ff / temps
        + 2 * TQ * S * 4                                   # live score/prob tiles
        + TQ * TM * (4 + 2)                                # one MLP act tile
    )
    vmem_needed = 2 * const_bytes + int(1.5 * act_bytes) + (2 << 20)
    vmem_limit = int(min(max(vmem_needed, 32 << 20), int(0.85 * vmem_cap)))

    kernel = functools.partial(_tblock_kernel, n_heads=n_heads, eps=1e-5)

    out = pl.pallas_call(
        kernel,
        out_shape=jax.ShapeDtypeStruct((N, S, D), x.dtype),
        grid=(N, n_q_tiles),
        in_specs=[pl.BlockSpec((1, TQ, D), lambda n, qi: (n, qi, 0)),  # Q rows
                  pl.BlockSpec((1, S, D), lambda n, qi: (n, 0, 0))]    # full K/V
                 + [const_spec(a) for a in consts],
        out_specs=pl.BlockSpec((1, TQ, D), lambda n, qi: (n, qi, 0)),
        scratch_shapes=[pltpu.VMEM((TQ, D), jnp.bfloat16)],            # context
        compiler_params=pltpu.CompilerParams(
            dimension_semantics=("parallel", "parallel"),
            vmem_limit_bytes=vmem_limit),
    )(x, x, *consts)
    return jnp.transpose(out, (1, 0, 2))                  # back to (S, N, D)


def reference(x_snd, params, n_heads):
    """Pure-JAX f32 reference with identical semantics (for validation)."""
    S, N, D = x_snd.shape
    dh = D // n_heads
    x = jnp.transpose(x_snd, (1, 0, 2)).astype(jnp.float32)          # (N,S,D)
    qkv = jnp.einsum("nsd,ed->nse", x, params["wqkv"]) + params["bqkv"]
    q, k, v = jnp.split(qkv, 3, axis=-1)

    def heads(t):
        return t.reshape(N, S, n_heads, dh).transpose(0, 2, 1, 3)

    q, k, v = heads(q) / jnp.sqrt(dh), heads(k), heads(v)
    s = jnp.einsum("nhqd,nhkd->nhqk", q, k)
    p = jax.nn.softmax(s, axis=-1)
    a = jnp.einsum("nhqk,nhkd->nhqd", p, v).transpose(0, 2, 1, 3).reshape(N, S, D)
    a = a @ params["wo"].T + params["bo"]

    def ln(h, g, b):
        mu = h.mean(-1, keepdims=True)
        var = ((h - mu) ** 2).mean(-1, keepdims=True)
        return (h - mu) / jnp.sqrt(var + 1e-5) * g + b

    h1 = ln(x + a, params["g1"], params["beta1"])
    ff = jnp.maximum(h1 @ params["w1"].T + params["b1"], 0.0)
    ff = ff @ params["w2"].T + params["b2"]
    h2 = ln(h1 + ff, params["g2"], params["beta2"])
    return jnp.transpose(h2, (1, 0, 2))


def init_params(key, d_model, d_mlp):
    ks = jax.random.split(key, 8)
    sc = 0.05
    return {
        # nn.MultiheadAttention: in_proj (3D, D) + bias, out_proj Linear(D, D)
        "wqkv": sc * jax.random.normal(ks[0], (3 * d_model, d_model), jnp.float32),
        "bqkv": sc * jax.random.normal(ks[1], (3 * d_model,), jnp.float32),
        "wo": sc * jax.random.normal(ks[2], (d_model, d_model), jnp.float32),
        "bo": sc * jax.random.normal(ks[3], (d_model,), jnp.float32),
        # linear1: (d_mlp, d_model), linear2: (d_model, d_mlp)
        "w1": sc * jax.random.normal(ks[4], (d_mlp, d_model), jnp.float32),
        "b1": sc * jax.random.normal(ks[5], (d_mlp,), jnp.float32),
        "w2": sc * jax.random.normal(ks[6], (d_model, d_mlp), jnp.float32),
        "b2": sc * jax.random.normal(ks[7], (d_model,), jnp.float32),
        # LayerNorms (default init: gamma=1, beta=0)
        "g1": jnp.ones((d_model,), jnp.float32),
        "beta1": jnp.zeros((d_model,), jnp.float32),
        "g2": jnp.ones((d_model,), jnp.float32),
        "beta2": jnp.zeros((d_model,), jnp.float32),
    }


if __name__ == "__main__":
    # Lane-aligned small shapes: seq=8, batch=2, d_model=128, n_heads=4 (dh=32),
    # d_mlp=256.  PyTorch MultiheadAttention default layout is (S, N, E).
    S, N, D, H, D_MLP = 8, 2, 128, 4, 256
    key = jax.random.PRNGKey(0)
    kx, kp = jax.random.split(key)
    x = jax.random.normal(kx, (S, N, D), jnp.float32)
    params = init_params(kp, D, D_MLP)

    out = transformer_block(x, params, n_heads=H)
    out = jax.block_until_ready(out)

    ref = jax.block_until_ready(reference(x, params, n_heads=H))
    assert out.shape == (S, N, D)
    # bf16 matmuls + approx reciprocal -> slightly looser tolerance than f32.
    assert jnp.allclose(out, ref, atol=2e-2, rtol=2e-2), "mismatch vs reference"
    print("KERNEL_OK")
</pallas_src>

<mosaic_0001>
module attributes {stable_mosaic.version = 11 : i64} {
  func.func @_tblock_kernel(%arg0: i32, %arg1: i32, %arg2: memref<1x8x128xf32, #tpu.memory_space<vmem>>, %arg3: memref<1x8x128xf32, #tpu.memory_space<vmem>>, %arg4: memref<128x128xbf16, #tpu.memory_space<vmem>>, %arg5: memref<1x128xf32, #tpu.memory_space<vmem>>, %arg6: memref<128x256xbf16, #tpu.memory_space<vmem>>, %arg7: memref<1x256xf32, #tpu.memory_space<vmem>>, %arg8: memref<128x128xbf16, #tpu.memory_space<vmem>>, %arg9: memref<1x128xf32, #tpu.memory_space<vmem>>, %arg10: memref<1x128x256xbf16, #tpu.memory_space<vmem>>, %arg11: memref<1x1x256xf32, #tpu.memory_space<vmem>>, %arg12: memref<1x256x128xbf16, #tpu.memory_space<vmem>>, %arg13: memref<1x128xf32, #tpu.memory_space<vmem>>, %arg14: memref<1x128xf32, #tpu.memory_space<vmem>>, %arg15: memref<1x128xf32, #tpu.memory_space<vmem>>, %arg16: memref<1x128xf32, #tpu.memory_space<vmem>>, %arg17: memref<1x128xf32, #tpu.memory_space<vmem>>, %arg18: memref<1x8x128xf32, #tpu.memory_space<vmem>>, %arg19: memref<8x128xbf16, #tpu.memory_space<vmem>>) attributes {dimension_semantics = [#tpu.dimension_semantics<parallel>, #tpu.dimension_semantics<parallel>], iteration_bounds = array<i64: 2, 1>, scalar_prefetch = 0 : i64, scratch_operands = 1 : i64, tpu.core_type = #tpu.core_type<tc>, window_params = [{transform_indices = @transform_0, window_bounds = array<i64: 1, 8, 128>}, {transform_indices = @transform_1, window_bounds = array<i64: 1, 8, 128>}, {pipeline_mode = #tpu.pipeline_mode<synchronous>, transform_indices = @transform_2, window_bounds = array<i64: 128, 128>}, {pipeline_mode = #tpu.pipeline_mode<synchronous>, transform_indices = @transform_3, window_bounds = array<i64: 1, 128>}, {pipeline_mode = #tpu.pipeline_mode<synchronous>, transform_indices = @transform_4, window_bounds = array<i64: 128, 256>}, {pipeline_mode = #tpu.pipeline_mode<synchronous>, transform_indices = @transform_5, window_bounds = array<i64: 1, 256>}, {pipeline_mode = #tpu.pipeline_mode<synchronous>, transform_indices = @transform_6, window_bounds = array<i64: 128, 128>}, {pipeline_mode = #tpu.pipeline_mode<synchronous>, transform_indices = @transform_7, window_bounds = array<i64: 1, 128>}, {pipeline_mode = #tpu.pipeline_mode<synchronous>, transform_indices = @transform_8, window_bounds = array<i64: 1, 128, 256>}, {pipeline_mode = #tpu.pipeline_mode<synchronous>, transform_indices = @transform_9, window_bounds = array<i64: 1, 1, 256>}, {pipeline_mode = #tpu.pipeline_mode<synchronous>, transform_indices = @transform_10, window_bounds = array<i64: 1, 256, 128>}, {pipeline_mode = #tpu.pipeline_mode<synchronous>, transform_indices = @transform_11, window_bounds = array<i64: 1, 128>}, {pipeline_mode = #tpu.pipeline_mode<synchronous>, transform_indices = @transform_12, window_bounds = array<i64: 1, 128>}, {pipeline_mode = #tpu.pipeline_mode<synchronous>, transform_indices = @transform_13, window_bounds = array<i64: 1, 128>}, {pipeline_mode = #tpu.pipeline_mode<synchronous>, transform_indices = @transform_14, window_bounds = array<i64: 1, 128>}, {pipeline_mode = #tpu.pipeline_mode<synchronous>, transform_indices = @transform_15, window_bounds = array<i64: 1, 128>}, {transform_indices = @transform_16, window_bounds = array<i64: 1, 8, 128>}]} {
    %c0 = arith.constant 0 : index
    %c0_0 = arith.constant 0 : index
    %c0_1 = arith.constant 0 : index
    %0 = vector.load %arg2[%c0, %c0_0, %c0_1] : memref<1x8x128xf32, #tpu.memory_space<vmem>>, vector<1x8x128xf32>
    %1 = vector.shape_cast %0 : vector<1x8x128xf32> to vector<8x128xf32>
    %2 = arith.truncf %1 : vector<8x128xf32> to vector<8x128xbf16>
    %c0_2 = arith.constant 0 : index
    %c0_3 = arith.constant 0 : index
    %c0_4 = arith.constant 0 : index
    %3 = vector.load %arg3[%c0_2, %c0_3, %c0_4] : memref<1x8x128xf32, #tpu.memory_space<vmem>>, vector<1x8x128xf32>
    %4 = vector.shape_cast %3 : vector<1x8x128xf32> to vector<8x128xf32>
    %5 = arith.truncf %4 : vector<8x128xf32> to vector<8x128xbf16>
    %c0_5 = arith.constant 0 : index
    %c0_6 = arith.constant 0 : index
    %6 = vector.load %arg4[%c0_5, %c0_6] : memref<128x128xbf16, #tpu.memory_space<vmem>>, vector<128x128xbf16>
    %cst = arith.constant dense<0.000000e+00> : vector<8x128xf32>
    %7 = tpu.matmul %2, %6, %cst {dimension_numbers = #tpu.dot_dimension_numbers<[1], [0], [0], [1], [0, 0, 1, 1], [], []>} : vector<8x128xbf16>, vector<128x128xbf16>, vector<8x128xf32> -> vector<8x128xf32>
    %c0_7 = arith.constant 0 : index
    %c0_8 = arith.constant 0 : index
    %8 = vector.load %arg5[%c0_7, %c0_8] : memref<1x128xf32, #tpu.memory_space<vmem>>, vector<1x128xf32>
    %9 = vector.broadcast %8 : vector<1x128xf32> to vector<8x128xf32>
    %10 = arith.addf %7, %9 : vector<8x128xf32>
    %11 = arith.truncf %10 : vector<8x128xf32> to vector<8x128xbf16>
    %c0_9 = arith.constant 0 : index
    %c0_10 = arith.constant 0 : index
    %12 = vector.load %arg6[%c0_9, %c0_10] : memref<128x256xbf16, #tpu.memory_space<vmem>>, vector<128x256xbf16>
    %cst_11 = arith.constant dense<0.000000e+00> : vector<8x256xf32>
    %13 = tpu.matmul %5, %12, %cst_11 {dimension_numbers = #tpu.dot_dimension_numbers<[1], [0], [0], [1], [0, 0, 1, 1], [], []>} : vector<8x128xbf16>, vector<128x256xbf16>, vector<8x256xf32> -> vector<8x256xf32>
    %c0_12 = arith.constant 0 : index
    %c0_13 = arith.constant 0 : index
    %14 = vector.load %arg7[%c0_12, %c0_13] : memref<1x256xf32, #tpu.memory_space<vmem>>, vector<1x256xf32>
    %15 = vector.broadcast %14 : vector<1x256xf32> to vector<8x256xf32>
    %16 = arith.addf %13, %15 : vector<8x256xf32>
    %17 = vector.extract_strided_slice %16 {offsets = [0, 0], sizes = [8, 128], strides = [1, 1]} : vector<8x256xf32> to vector<8x128xf32>
    %18 = arith.truncf %17 : vector<8x128xf32> to vector<8x128xbf16>
    %19 = vector.extract_strided_slice %16 {offsets = [0, 128], sizes = [8, 128], strides = [1, 1]} : vector<8x256xf32> to vector<8x128xf32>
    %20 = arith.truncf %19 : vector<8x128xf32> to vector<8x128xbf16>
    %21 = vector.extract_strided_slice %11 {offsets = [0, 0], sizes = [8, 32], strides = [1, 1]} : vector<8x128xbf16> to vector<8x32xbf16>
    %22 = vector.extract_strided_slice %18 {offsets = [0, 0], sizes = [8, 32], strides = [1, 1]} : vector<8x128xbf16> to vector<8x32xbf16>
    %cst_14 = arith.constant dense<0.000000e+00> : vector<8x8xf32>
    %23 = tpu.matmul %21, %22, %cst_14 {dimension_numbers = #tpu.dot_dimension_numbers<[1], [1], [0], [0], [0, 0, 1, 0], [], []>} : vector<8x32xbf16>, vector<8x32xbf16>, vector<8x8xf32> -> vector<8x8xf32>
    %cst_15 = arith.constant dense<0xFF800000> : vector<8xf32>
    %24 = vector.multi_reduction <maximumf>, %23, %cst_15 [1] : vector<8x8xf32> to vector<8xf32>
    %25 = vector.shape_cast %24 : vector<8xf32> to vector<8x1xf32>
    %26 = vector.broadcast %25 : vector<8x1xf32> to vector<8x8xf32>
    %27 = arith.subf %23, %26 : vector<8x8xf32>
    %28 = math.exp %27 : vector<8x8xf32>
    %cst_16 = arith.constant dense<0.000000e+00> : vector<8xf32>
    %29 = vector.multi_reduction <add>, %28, %cst_16 [1] : vector<8x8xf32> to vector<8xf32>
    %30 = vector.shape_cast %29 : vector<8xf32> to vector<8x1xf32>
    %31 = tpu.reciprocal %30 {approx = true} : vector<8x1xf32> -> vector<8x1xf32>
    %32 = vector.broadcast %31 : vector<8x1xf32> to vector<8x8xf32>
    %33 = arith.mulf %28, %32 : vector<8x8xf32>
    %34 = arith.truncf %33 : vector<8x8xf32> to vector<8x8xbf16>
    %35 = vector.extract_strided_slice %20 {offsets = [0, 0], sizes = [8, 32], strides = [1, 1]} : vector<8x128xbf16> to vector<8x32xbf16>
    %cst_17 = arith.constant dense<0.000000e+00> : vector<8x32xf32>
    %36 = tpu.matmul %34, %35, %cst_17 {dimension_numbers = #tpu.dot_dimension_numbers<[1], [0], [0], [1], [0, 0, 1, 1], [], []>} : vector<8x8xbf16>, vector<8x32xbf16>, vector<8x32xf32> -> vector<8x32xf32>
    %37 = arith.truncf %36 : vector<8x32xf32> to vector<8x32xbf16>
    %c0_18 = arith.constant 0 : index
    %c0_19 = arith.constant 0 : index
    %38 = vector.load %arg19[%c0_18, %c0_19] : memref<8x128xbf16, #tpu.memory_space<vmem>>, vector<8x32xbf16>
    tpu.vector_store %arg19[%c0_18, %c0_19], %37 {strides = array<i32>} : memref<8x128xbf16, #tpu.memory_space<vmem>>, vector<8x32xbf16>,
    %39 = vector.extract_strided_slice %11 {offsets = [0, 32], sizes = [8, 32], strides = [1, 1]} : vector<8x128xbf16> to vector<8x32xbf16>
    %40 = vector.extract_strided_slice %18 {offsets = [0, 32], sizes = [8, 32], strides = [1, 1]} : vector<8x128xbf16> to vector<8x32xbf16>
    %cst_20 = arith.constant dense<0.000000e+00> : vector<8x8xf32>
    %41 = tpu.matmul %39, %40, %cst_20 {dimension_numbers = #tpu.dot_dimension_numbers<[1], [1], [0], [0], [0, 0, 1, 0], [], []>} : vector<8x32xbf16>, vector<8x32xbf16>, vector<8x8xf32> -> vector<8x8xf32>
    %cst_21 = arith.constant dense<0xFF800000> : vector<8xf32>
    %42 = vector.multi_reduction <maximumf>, %41, %cst_21 [1] : vector<8x8xf32> to vector<8xf32>
    %43 = vector.shape_cast %42 : vector<8xf32> to vector<8x1xf32>
    %44 = vector.broadcast %43 : vector<8x1xf32> to vector<8x8xf32>
    %45 = arith.subf %41, %44 : vector<8x8xf32>
    %46 = math.exp %45 : vector<8x8xf32>
    %cst_22 = arith.constant dense<0.000000e+00> : vector<8xf32>
    %47 = vector.multi_reduction <add>, %46, %cst_22 [1] : vector<8x8xf32> to vector<8xf32>
    %48 = vector.shape_cast %47 : vector<8xf32> to vector<8x1xf32>
    %49 = tpu.reciprocal %48 {approx = true} : vector<8x1xf32> -> vector<8x1xf32>
    %50 = vector.broadcast %49 : vector<8x1xf32> to vector<8x8xf32>
    %51 = arith.mulf %46, %50 : vector<8x8xf32>
    %52 = arith.truncf %51 : vector<8x8xf32> to vector<8x8xbf16>
    %53 = vector.extract_strided_slice %20 {offsets = [0, 32], sizes = [8, 32], strides = [1, 1]} : vector<8x128xbf16> to vector<8x32xbf16>
    %cst_23 = arith.constant dense<0.000000e+00> : vector<8x32xf32>
    %54 = tpu.matmul %52, %53, %cst_23 {dimension_numbers = #tpu.dot_dimension_numbers<[1], [0], [0], [1], [0, 0, 1, 1], [], []>} : vector<8x8xbf16>, vector<8x32xbf16>, vector<8x32xf32> -> vector<8x32xf32>
    %55 = arith.truncf %54 : vector<8x32xf32> to vector<8x32xbf16>
    %c0_24 = arith.constant 0 : index
    %c32 = arith.constant 32 : index
    %56 = vector.load %arg19[%c0_24, %c32] : memref<8x128xbf16, #tpu.memory_space<vmem>>, vector<8x32xbf16>
    tpu.vector_store %arg19[%c0_24, %c32], %55 {strides = array<i32>} : memref<8x128xbf16, #tpu.memory_space<vmem>>, vector<8x32xbf16>,
    %57 = vector.extract_strided_slice %11 {offsets = [0, 64], sizes = [8, 32], strides = [1, 1]} : vector<8x128xbf16> to vector<8x32xbf16>
    %58 = vector.extract_strided_slice %18 {offsets = [0, 64], sizes = [8, 32], strides = [1, 1]} : vector<8x128xbf16> to vector<8x32xbf16>
    %cst_25 = arith.constant dense<0.000000e+00> : vector<8x8xf32>
    %59 = tpu.matmul %57, %58, %cst_25 {dimension_numbers = #tpu.dot_dimension_numbers<[1], [1], [0], [0], [0, 0, 1, 0], [], []>} : vector<8x32xbf16>, vector<8x32xbf16>, vector<8x8xf32> -> vector<8x8xf32>
    %cst_26 = arith.constant dense<0xFF800000> : vector<8xf32>
    %60 = vector.multi_reduction <maximumf>, %59, %cst_26 [1] : vector<8x8xf32> to vector<8xf32>
    %61 = vector.shape_cast %60 : vector<8xf32> to vector<8x1xf32>
    %62 = vector.broadcast %61 : vector<8x1xf32> to vector<8x8xf32>
    %63 = arith.subf %59, %62 : vector<8x8xf32>
    %64 = math.exp %63 : vector<8x8xf32>
    %cst_27 = arith.constant dense<0.000000e+00> : vector<8xf32>
    %65 = vector.multi_reduction <add>, %64, %cst_27 [1] : vector<8x8xf32> to vector<8xf32>
    %66 = vector.shape_cast %65 : vector<8xf32> to vector<8x1xf32>
    %67 = tpu.reciprocal %66 {approx = true} : vector<8x1xf32> -> vector<8x1xf32>
    %68 = vector.broadcast %67 : vector<8x1xf32> to vector<8x8xf32>
    %69 = arith.mulf %64, %68 : vector<8x8xf32>
    %70 = arith.truncf %69 : vector<8x8xf32> to vector<8x8xbf16>
    %71 = vector.extract_strided_slice %20 {offsets = [0, 64], sizes = [8, 32], strides = [1, 1]} : vector<8x128xbf16> to vector<8x32xbf16>
    %cst_28 = arith.constant dense<0.000000e+00> : vector<8x32xf32>
    %72 = tpu.matmul %70, %71, %cst_28 {dimension_numbers = #tpu.dot_dimension_numbers<[1], [0], [0], [1], [0, 0, 1, 1], [], []>} : vector<8x8xbf16>, vector<8x32xbf16>, vector<8x32xf32> -> vector<8x32xf32>
    %73 = arith.truncf %72 : vector<8x32xf32> to vector<8x32xbf16>
    %c0_29 = arith.constant 0 : index
    %c64 = arith.constant 64 : index
    %74 = vector.load %arg19[%c0_29, %c64] : memref<8x128xbf16, #tpu.memory_space<vmem>>, vector<8x32xbf16>
    tpu.vector_store %arg19[%c0_29, %c64], %73 {strides = array<i32>} : memref<8x128xbf16, #tpu.memory_space<vmem>>, vector<8x32xbf16>,
    %75 = vector.extract_strided_slice %11 {offsets = [0, 96], sizes = [8, 32], strides = [1, 1]} : vector<8x128xbf16> to vector<8x32xbf16>
    %76 = vector.extract_strided_slice %18 {offsets = [0, 96], sizes = [8, 32], strides = [1, 1]} : vector<8x128xbf16> to vector<8x32xbf16>
    %cst_30 = arith.constant dense<0.000000e+00> : vector<8x8xf32>
    %77 = tpu.matmul %75, %76, %cst_30 {dimension_numbers = #tpu.dot_dimension_numbers<[1], [1], [0], [0], [0, 0, 1, 0], [], []>} : vector<8x32xbf16>, vector<8x32xbf16>, vector<8x8xf32> -> vector<8x8xf32>
    %cst_31 = arith.constant dense<0xFF800000> : vector<8xf32>
    %78 = vector.multi_reduction <maximumf>, %77, %cst_31 [1] : vector<8x8xf32> to vector<8xf32>
    %79 = vector.shape_cast %78 : vector<8xf32> to vector<8x1xf32>
    %80 = vector.broadcast %79 : vector<8x1xf32> to vector<8x8xf32>
    %81 = arith.subf %77, %80 : vector<8x8xf32>
    %82 = math.exp %81 : vector<8x8xf32>
    %cst_32 = arith.constant dense<0.000000e+00> : vector<8xf32>
    %83 = vector.multi_reduction <add>, %82, %cst_32 [1] : vector<8x8xf32> to vector<8xf32>
    %84 = vector.shape_cast %83 : vector<8xf32> to vector<8x1xf32>
    %85 = tpu.reciprocal %84 {approx = true} : vector<8x1xf32> -> vector<8x1xf32>
    %86 = vector.broadcast %85 : vector<8x1xf32> to vector<8x8xf32>
    %87 = arith.mulf %82, %86 : vector<8x8xf32>
    %88 = arith.truncf %87 : vector<8x8xf32> to vector<8x8xbf16>
    %89 = vector.extract_strided_slice %20 {offsets = [0, 96], sizes = [8, 32], strides = [1, 1]} : vector<8x128xbf16> to vector<8x32xbf16>
    %cst_33 = arith.constant dense<0.000000e+00> : vector<8x32xf32>
    %90 = tpu.matmul %88, %89, %cst_33 {dimension_numbers = #tpu.dot_dimension_numbers<[1], [0], [0], [1], [0, 0, 1, 1], [], []>} : vector<8x8xbf16>, vector<8x32xbf16>, vector<8x32xf32> -> vector<8x32xf32>
    %91 = arith.truncf %90 : vector<8x32xf32> to vector<8x32xbf16>
    %c0_34 = arith.constant 0 : index
    %c96 = arith.constant 96 : index
    %92 = vector.load %arg19[%c0_34, %c96] : memref<8x128xbf16, #tpu.memory_space<vmem>>, vector<8x32xbf16>
    tpu.vector_store %arg19[%c0_34, %c96], %91 {strides = array<i32>} : memref<8x128xbf16, #tpu.memory_space<vmem>>, vector<8x32xbf16>,
    %c0_35 = arith.constant 0 : index
    %c0_36 = arith.constant 0 : index
    %93 = vector.load %arg19[%c0_35, %c0_36] : memref<8x128xbf16, #tpu.memory_space<vmem>>, vector<8x128xbf16>
    %c0_37 = arith.constant 0 : index
    %c0_38 = arith.constant 0 : index
    %94 = vector.load %arg8[%c0_37, %c0_38] : memref<128x128xbf16, #tpu.memory_space<vmem>>, vector<128x128xbf16>
    %cst_39 = arith.constant dense<0.000000e+00> : vector<8x128xf32>
    %95 = tpu.matmul %93, %94, %cst_39 {dimension_numbers = #tpu.dot_dimension_numbers<[1], [0], [0], [1], [0, 0, 1, 1], [], []>} : vector<8x128xbf16>, vector<128x128xbf16>, vector<8x128xf32> -> vector<8x128xf32>
    %c0_40 = arith.constant 0 : index
    %c0_41 = arith.constant 0 : index
    %96 = vector.load %arg9[%c0_40, %c0_41] : memref<1x128xf32, #tpu.memory_space<vmem>>, vector<1x128xf32>
    %97 = vector.broadcast %96 : vector<1x128xf32> to vector<8x128xf32>
    %98 = arith.addf %95, %97 : vector<8x128xf32>
    %99 = arith.addf %1, %98 : vector<8x128xf32>
    %cst_42 = arith.constant dense<0.000000e+00> : vector<8xf32>
    %100 = vector.multi_reduction <add>, %99, %cst_42 [1] : vector<8x128xf32> to vector<8xf32>
    %101 = vector.shape_cast %100 : vector<8xf32> to vector<8x1xf32>
    %cst_43 = arith.constant 1.280000e+02 : f32
    %102 = vector.broadcast %cst_43 : f32 to vector<8x1xf32>
    %103 = arith.divf %101, %102 : vector<8x1xf32>
    %104 = vector.broadcast %103 : vector<8x1xf32> to vector<8x128xf32>
    %105 = arith.subf %99, %104 : vector<8x128xf32>
    %106 = arith.mulf %105, %105 : vector<8x128xf32>
    %cst_44 = arith.constant dense<0.000000e+00> : vector<8xf32>
    %107 = vector.multi_reduction <add>, %106, %cst_44 [1] : vector<8x128xf32> to vector<8xf32>
    %108 = vector.shape_cast %107 : vector<8xf32> to vector<8x1xf32>
    %cst_45 = arith.constant 1.280000e+02 : f32
    %109 = vector.broadcast %cst_45 : f32 to vector<8x1xf32>
    %110 = arith.divf %108, %109 : vector<8x1xf32>
    %111 = vector.broadcast %103 : vector<8x1xf32> to vector<8x128xf32>
    %112 = arith.subf %99, %111 : vector<8x128xf32>
    %cst_46 = arith.constant 9.99999974E-6 : f32
    %113 = vector.broadcast %cst_46 : f32 to vector<8x1xf32>
    %114 = arith.addf %110, %113 : vector<8x1xf32>
    %115 = math.rsqrt %114 : vector<8x1xf32>
    %c0_47 = arith.constant 0 : index
    %c0_48 = arith.constant 0 : index
    %116 = vector.load %arg14[%c0_47, %c0_48] : memref<1x128xf32, #tpu.memory_space<vmem>>, vector<1x128xf32>
    %117 = vector.broadcast %115 : vector<8x1xf32> to vector<8x128xf32>
    %118 = vector.broadcast %116 : vector<1x128xf32> to vector<8x128xf32>
    %119 = arith.mulf %117, %118 : vector<8x128xf32>
    %120 = arith.mulf %112, %119 : vector<8x128xf32>
    %c0_49 = arith.constant 0 : index
    %c0_50 = arith.constant 0 : index
    %121 = vector.load %arg15[%c0_49, %c0_50] : memref<1x128xf32, #tpu.memory_space<vmem>>, vector<1x128xf32>
    %122 = vector.broadcast %121 : vector<1x128xf32> to vector<8x128xf32>
    %123 = arith.addf %120, %122 : vector<8x128xf32>
    %124 = arith.truncf %123 : vector<8x128xf32> to vector<8x128xbf16>
    %c0_51 = arith.constant 0 : index
    %c0_52 = arith.constant 0 : index
    %125 = vector.load %arg13[%c0_51, %c0_52] : memref<1x128xf32, #tpu.memory_space<vmem>>, vector<1x128xf32>
    %126 = vector.shape_cast %125 : vector<1x128xf32> to vector<1x128xf32>
    %127 = vector.broadcast %126 : vector<1x128xf32> to vector<8x128xf32>
    %c0_i32 = arith.constant 0 : i32
    %128 = arith.index_cast %c0_i32 : i32 to index
    %c0_53 = arith.constant 0 : index
    %c0_54 = arith.constant 0 : index
    %129 = vector.load %arg10[%128, %c0_53, %c0_54] : memref<1x128x256xbf16, #tpu.memory_space<vmem>>, vector<1x128x256xbf16>
    %130 = vector.shape_cast %129 : vector<1x128x256xbf16> to vector<128x256xbf16>
    %cst_55 = arith.constant dense<0.000000e+00> : vector<8x256xf32>
    %131 = tpu.matmul %124, %130, %cst_55 {dimension_numbers = #tpu.dot_dimension_numbers<[1], [0], [0], [1], [0, 0, 1, 1], [], []>} : vector<8x128xbf16>, vector<128x256xbf16>, vector<8x256xf32> -> vector<8x256xf32>
    %132 = arith.index_cast %c0_i32 : i32 to index
    %c0_56 = arith.constant 0 : index
    %c0_57 = arith.constant 0 : index
    %133 = vector.load %arg11[%132, %c0_56, %c0_57] : memref<1x1x256xf32, #tpu.memory_space<vmem>>, vector<1x1x256xf32>
    %134 = vector.shape_cast %133 : vector<1x1x256xf32> to vector<1x256xf32>
    %135 = vector.broadcast %134 : vector<1x256xf32> to vector<8x256xf32>
    %136 = arith.addf %131, %135 : vector<8x256xf32>
    %cst_58 = arith.constant 0.000000e+00 : f32
    %137 = vector.broadcast %cst_58 : f32 to vector<8x256xf32>
    %138 = arith.maximumf %136, %137 : vector<8x256xf32>
    %139 = arith.truncf %138 : vector<8x256xf32> to vector<8x256xbf16>
    %140 = arith.index_cast %c0_i32 : i32 to index
    %c0_59 = arith.constant 0 : index
    %c0_60 = arith.constant 0 : index
    %141 = vector.load %arg12[%140, %c0_59, %c0_60] : memref<1x256x128xbf16, #tpu.memory_space<vmem>>, vector<1x256x128xbf16>
    %142 = vector.shape_cast %141 : vector<1x256x128xbf16> to vector<256x128xbf16>
    %cst_61 = arith.constant dense<0.000000e+00> : vector<8x128xf32>
    %143 = tpu.matmul %139, %142, %cst_61 {dimension_numbers = #tpu.dot_dimension_numbers<[1], [0], [0], [1], [0, 0, 1, 1], [], []>} : vector<8x256xbf16>, vector<256x128xbf16>, vector<8x128xf32> -> vector<8x128xf32>
    %144 = arith.addf %127, %143 : vector<8x128xf32>
    %c1_i32 = arith.constant 1 : i32
    %145 = arith.addf %123, %144 : vector<8x128xf32>
    %cst_62 = arith.constant dense<0.000000e+00> : vector<8xf32>
    %146 = vector.multi_reduction <add>, %145, %cst_62 [1] : vector<8x128xf32> to vector<8xf32>
    %147 = vector.shape_cast %146 : vector<8xf32> to vector<8x1xf32>
    %cst_63 = arith.constant 1.280000e+02 : f32
    %148 = vector.broadcast %cst_63 : f32 to vector<8x1xf32>
    %149 = arith.divf %147, %148 : vector<8x1xf32>
    %150 = vector.broadcast %149 : vector<8x1xf32> to vector<8x128xf32>
    %151 = arith.subf %145, %150 : vector<8x128xf32>
    %152 = arith.mulf %151, %151 : vector<8x128xf32>
    %cst_64 = arith.constant dense<0.000000e+00> : vector<8xf32>
    %153 = vector.multi_reduction <add>, %152, %cst_64 [1] : vector<8x128xf32> to vector<8xf32>
    %154 = vector.shape_cast %153 : vector<8xf32> to vector<8x1xf32>
    %cst_65 = arith.constant 1.280000e+02 : f32
    %155 = vector.broadcast %cst_65 : f32 to vector<8x1xf32>
    %156 = arith.divf %154, %155 : vector<8x1xf32>
    %157 = vector.broadcast %149 : vector<8x1xf32> to vector<8x128xf32>
    %158 = arith.subf %145, %157 : vector<8x128xf32>
    %cst_66 = arith.constant 9.99999974E-6 : f32
    %159 = vector.broadcast %cst_66 : f32 to vector<8x1xf32>
    %160 = arith.addf %156, %159 : vector<8x1xf32>
    %161 = math.rsqrt %160 : vector<8x1xf32>
    %c0_67 = arith.constant 0 : index
    %c0_68 = arith.constant 0 : index
    %162 = vector.load %arg16[%c0_67, %c0_68] : memref<1x128xf32, #tpu.memory_space<vmem>>, vector<1x128xf32>
    %163 = vector.broadcast %161 : vector<8x1xf32> to vector<8x128xf32>
    %164 = vector.broadcast %162 : vector<1x128xf32> to vector<8x128xf32>
    %165 = arith.mulf %163, %164 : vector<8x128xf32>
    %166 = arith.mulf %158, %165 : vector<8x128xf32>
    %c0_69 = arith.constant 0 : index
    %c0_70 = arith.constant 0 : index
    %167 = vector.load %arg17[%c0_69, %c0_70] : memref<1x128xf32, #tpu.memory_space<vmem>>, vector<1x128xf32>
    %168 = vector.broadcast %167 : vector<1x128xf32> to vector<8x128xf32>
    %169 = arith.addf %166, %168 : vector<8x128xf32>
    %c0_71 = arith.constant 0 : index
    %c0_72 = arith.constant 0 : index
    %c0_73 = arith.constant 0 : index
    %170 = vector.load %arg18[%c0_71, %c0_72, %c0_73] : memref<1x8x128xf32, #tpu.memory_space<vmem>>, vector<1x8x128xf32>
    %171 = vector.shape_cast %170 : vector<1x8x128xf32> to vector<8x128xf32>
    %172 = vector.shape_cast %169 : vector<8x128xf32> to vector<1x8x128xf32>
    tpu.vector_store %arg18[%c0_71, %c0_72, %c0_73], %172 {strides = array<i32>} : memref<1x8x128xf32, #tpu.memory_space<vmem>>, vector<1x8x128xf32>,
    return
  }
  func.func @transform_0(%arg0: i32, %arg1: i32) -> (i32, i32, i32) {
    %c0_i32 = arith.constant 0 : i32
    %c0_i32_0 = arith.constant 0 : i32
    return %arg0, %arg1, %c0_i32 : i32, i32, i32
  }
  func.func @transform_1(%arg0: i32, %arg1: i32) -> (i32, i32, i32) {
    %c0_i32 = arith.constant 0 : i32
    %c0_i32_0 = arith.constant 0 : i32
    %c0_i32_1 = arith.constant 0 : i32
    return %arg0, %c0_i32, %c0_i32_0 : i32, i32, i32
  }
  func.func @transform_2(%arg0: i32, %arg1: i32) -> (i32, i32) {
    %c0_i32 = arith.constant 0 : i32
    %c0_i32_0 = arith.constant 0 : i32
    %c0_i32_1 = arith.constant 0 : i32
    return %c0_i32, %c0_i32_0 : i32, i32
  }
  func.func @transform_3(%arg0: i32, %arg1: i32) -> (i32, i32) {
    %c0_i32 = arith.constant 0 : i32
    %c0_i32_0 = arith.constant 0 : i32
    %c0_i32_1 = arith.constant 0 : i32
    return %c0_i32, %c0_i32_0 : i32, i32
  }
  func.func @transform_4(%arg0: i32, %arg1: i32) -> (i32, i32) {
    %c0_i32 = arith.constant 0 : i32
    %c0_i32_0 = arith.constant 0 : i32
    %c0_i32_1 = arith.constant 0 : i32
    return %c0_i32, %c0_i32_0 : i32, i32
  }
  func.func @transform_5(%arg0: i32, %arg1: i32) -> (i32, i32) {
    %c0_i32 = arith.constant 0 : i32
    %c0_i32_0 = arith.constant 0 : i32
    %c0_i32_1 = arith.constant 0 : i32
    return %c0_i32, %c0_i32_0 : i32, i32
  }
  func.func @transform_6(%arg0: i32, %arg1: i32) -> (i32, i32) {
    %c0_i32 = arith.constant 0 : i32
    %c0_i32_0 = arith.constant 0 : i32
    %c0_i32_1 = arith.constant 0 : i32
    return %c0_i32, %c0_i32_0 : i32, i32
  }
  func.func @transform_7(%arg0: i32, %arg1: i32) -> (i32, i32) {
    %c0_i32 = arith.constant 0 : i32
    %c0_i32_0 = arith.constant 0 : i32
    %c0_i32_1 = arith.constant 0 : i32
    return %c0_i32, %c0_i32_0 : i32, i32
  }
  func.func @transform_8(%arg0: i32, %arg1: i32) -> (i32, i32, i32) {
    %c0_i32 = arith.constant 0 : i32
    %c0_i32_0 = arith.constant 0 : i32
    %c0_i32_1 = arith.constant 0 : i32
    %c0_i32_2 = arith.constant 0 : i32
    return %c0_i32, %c0_i32_0, %c0_i32_1 : i32, i32, i32
  }
  func.func @transform_9(%arg0: i32, %arg1: i32) -> (i32, i32, i32) {
    %c0_i32 = arith.constant 0 : i32
    %c0_i32_0 = arith.constant 0 : i32
    %c0_i32_1 = arith.constant 0 : i32
    %c0_i32_2 = arith.constant 0 : i32
    return %c0_i32, %c0_i32_0, %c0_i32_1 : i32, i32, i32
  }
  func.func @transform_10(%arg0: i32, %arg1: i32) -> (i32, i32, i32) {
    %c0_i32 = arith.constant 0 : i32
    %c0_i32_0 = arith.constant 0 : i32
    %c0_i32_1 = arith.constant 0 : i32
    %c0_i32_2 = arith.constant 0 : i32
    return %c0_i32, %c0_i32_0, %c0_i32_1 : i32, i32, i32
  }
  func.func @transform_11(%arg0: i32, %arg1: i32) -> (i32, i32) {
    %c0_i32 = arith.constant 0 : i32
    %c0_i32_0 = arith.constant 0 : i32
    %c0_i32_1 = arith.constant 0 : i32
    return %c0_i32, %c0_i32_0 : i32, i32
  }
  func.func @transform_12(%arg0: i32, %arg1: i32) -> (i32, i32) {
    %c0_i32 = arith.constant 0 : i32
    %c0_i32_0 = arith.constant 0 : i32
    %c0_i32_1 = arith.constant 0 : i32
    return %c0_i32, %c0_i32_0 : i32, i32
  }
  func.func @transform_13(%arg0: i32, %arg1: i32) -> (i32, i32) {
    %c0_i32 = arith.constant 0 : i32
    %c0_i32_0 = arith.constant 0 : i32
    %c0_i32_1 = arith.constant 0 : i32
    return %c0_i32, %c0_i32_0 : i32, i32
  }
  func.func @transform_14(%arg0: i32, %arg1: i32) -> (i32, i32) {
    %c0_i32 = arith.constant 0 : i32
    %c0_i32_0 = arith.constant 0 : i32
    %c0_i32_1 = arith.constant 0 : i32
    return %c0_i32, %c0_i32_0 : i32, i32
  }
  func.func @transform_15(%arg0: i32, %arg1: i32) -> (i32, i32) {
    %c0_i32 = arith.constant 0 : i32
    %c0_i32_0 = arith.constant 0 : i32
    %c0_i32_1 = arith.constant 0 : i32
    return %c0_i32, %c0_i32_0 : i32, i32
  }
  func.func @transform_16(%arg0: i32, %arg1: i32) -> (i32, i32, i32) {
    %c0_i32 = arith.constant 0 : i32
    %c0_i32_0 = arith.constant 0 : i32
    return %arg0, %arg1, %c0_i32 : i32, i32, i32
  }
}

</mosaic_0001>

<llo_original>
// kernel: tpu_custom_call.1
$region0: #{tpu_custom_call.1}
  #allocation0 [shape = 'u32[]', space=smem, size = 0x4, offset = 0x4, fixed_abs, tag = 'smem constant byte address 0x4 - core index']
  #allocation1 [shape = 'u32[144,128]{1,0:T(1,128)}', space=vmem, size = 0x12000, scoped, tag = 'internal scratch']
  #allocation2 [shape = 'bf16[8,128]{1,0:T(8,128)(2,1)}', space=vmem, size = 0x800, scoped, tag = 'scratch operand']
  %s0 = inlined_call_operand.hbm [shape: f32[2,8,128], index: 0, kind: input, shape index: {}]
  %s1 = inlined_call_operand.hbm [shape: f32[2,8,128], index: 1, kind: input, shape index: {}]
  %s2 = inlined_call_operand.hbm [shape: bf16[128,128], index: 2, kind: input, shape index: {}]
  %s3 = inlined_call_operand.vmem [shape: f32[1,128], index: 3, kind: input, shape index: {}]
  %s4 = inlined_call_operand.hbm [shape: bf16[128,256], index: 4, kind: input, shape index: {}]
  %s5 = inlined_call_operand.vmem [shape: f32[1,256], index: 5, kind: input, shape index: {}]
  %s6 = inlined_call_operand.hbm [shape: bf16[128,128], index: 6, kind: input, shape index: {}]
  %s7 = inlined_call_operand.vmem [shape: f32[1,128], index: 7, kind: input, shape index: {}]
  %s8 = inlined_call_operand.hbm [shape: bf16[1,128,256], index: 8, kind: input, shape index: {}]
  %s9 = inlined_call_operand.vmem [shape: f32[1,1,256], index: 9, kind: input, shape index: {}]
  %s10 = inlined_call_operand.hbm [shape: bf16[1,256,128], index: 10, kind: input, shape index: {}]
  %s11 = inlined_call_operand.vmem [shape: f32[1,128], index: 11, kind: input, shape index: {}]
  %s12 = inlined_call_operand.vmem [shape: f32[1,128], index: 12, kind: input, shape index: {}]
  %s13 = inlined_call_operand.vmem [shape: f32[1,128], index: 13, kind: input, shape index: {}]
  %s14 = inlined_call_operand.vmem [shape: f32[1,128], index: 14, kind: input, shape index: {}]
  %s15 = inlined_call_operand.vmem [shape: f32[1,128], index: 15, kind: input, shape index: {}]
  %s16 = inlined_call_operand.hbm [shape: f32[2,8,128], index: 16, kind: output, shape index: {}]
  %s17 = sld [smem:[#allocation0]]
  $region125: #{tpu_custom_call.1} parent=0
    _
  %s19 = ssub.s32 1, %s17
  %s20 = scalar_select 0, %s19, %s17
  $region1: #{tpu_custom_call.1} parent=0
    #allocation3 [shape = 'u8[8192]{0}', space=vmem, size = 0x2000, scoped, tag = 'input window, operand 0']
    #allocation4 [shape = 's32[2]{0}', space=sflag, size = 0x8, scoped, tag = 'scoped memory for tpu_custom_call.1']
    #allocation5 [shape = 's32[2]{0}', space=sflag, size = 0x8, scoped, tag = 'scoped memory for tpu_custom_call.1']
    #allocation6 [shape = 'u8[8192]{0}', space=vmem, size = 0x2000, scoped, tag = 'input window, operand 1']
    #allocation7 [shape = 's32[2]{0}', space=sflag, size = 0x8, scoped, tag = 'scoped memory for tpu_custom_call.1']
    #allocation8 [shape = 'u8[32768]{0}', space=vmem, size = 0x8000, scoped, tag = 'input window, operand 2, single buffered']
    #allocation9 [shape = 'u8[65536]{0}', space=vmem, size = 0x10000, scoped, tag = 'input window, operand 4, single buffered']
    #allocation10 [shape = 's32[1]{0}', space=sflag, size = 0x4, scoped, tag = 'scoped memory for tpu_custom_call.1']
    #allocation11 [shape = 'u8[32768]{0}', space=vmem, size = 0x8000, scoped, tag = 'input window, operand 6, single buffered']
    #allocation12 [shape = 'u8[65536]{0}', space=vmem, size = 0x10000, scoped, tag = 'input window, operand 8, single buffered']
    #allocation13 [shape = 's32[1]{0}', space=sflag, size = 0x4, scoped, tag = 'scoped memory for tpu_custom_call.1']
    #allocation14 [shape = 'u8[65536]{0}', space=vmem, size = 0x10000, scoped, tag = 'input window, operand 10, single buffered']
    #allocation15 [shape = 'u8[8192]{0}', space=vmem, size = 0x2000, scoped, tag = 'output window, operand 0']
    %21 = vsyncpa [#allocation4], 0
    %s22 = scalar_lea.sflag [#allocation4], 1
    %23 = vsyncpa %s22, 0
    %24 = vsyncpa [#allocation7], 0
    %s25 = scalar_lea.sflag [#allocation7], 1
    %26 = vsyncpa %s25, 0
    %27 = vsyncpa [#allocation10], 0
    %28 = vsyncpa [#allocation13], 0
    %29 = vsyncpa [#allocation5], 0
    %s30 = scalar_lea.sflag [#allocation5], 1
    %31 = vsyncpa %s30, 0
    loop: start=0, step=1, limit=4
    $region2: #{tpu_custom_call.1} parent=1 // loop_pre_header
      _
    $region3: #{tpu_custom_call.1} parent=1 // loop_header
      %s33 = sphi 0, %s37
      %p34 = scmp.ge.s32.totalorder %s33, 4
      %s40 = sphi 0, %s52
      %s41 = sphi 0, %s48
      %s42 = sphi 0, %s40
      %s43 = sphi 0, %s41
      %s44 = sphi 0, %s42
      %s45 = sphi 0, %s43
      %s57 = sphi 0, %s59
      %s60 = sphi 0, %s57
      %s61 = sphi 0, %s60
      %s77 = sphi 0, %s61
      %s83 = sphi 0, %s85
      %s86 = sphi 0, %s83
      %s87 = sphi 0, %s86
      %s103 = sphi 0, %s87
      %s107 = sphi 0, %s107
      %s109 = sphi 0, %s107
      %s110 = sphi 0, %s109
      %s124 = sphi 0, %s110
      %s128 = sphi 0, %s128
      %s130 = sphi 0, %s128
      %s131 = sphi 0, %s130
      %s145 = sphi 0, %s131
      %s149 = sphi 0, %s149
      %s151 = sphi 0, %s149
      %s152 = sphi 0, %s151
      %s166 = sphi 0, %s152
      %s170 = sphi 0, %s170
      %s172 = sphi 0, %s170
      %s173 = sphi 0, %s172
      %s187 = sphi 0, %s173
      %s191 = sphi 0, %s191
      %s193 = sphi 0, %s191
      %s194 = sphi 0, %s193
      %s208 = sphi 0, %s194
      %s212 = sphi 0, %s212
      %s214 = sphi 0, %s212
      %s215 = sphi 0, %s214
      %s229 = sphi 0, %s215
      %s233 = sphi 0, %s233
      %s235 = sphi 0, %s233
      %s236 = sphi 0, %s235
      %s250 = sphi 0, %s236
      %s254 = sphi 0, %s254
      %s256 = sphi 0, %s254
      %s257 = sphi 0, %s256
      %s271 = sphi 0, %s257
      %s275 = sphi 0, %s275
      %s277 = sphi 0, %s275
      %s278 = sphi 0, %s277
      %s292 = sphi 0, %s278
      %s296 = sphi 0, %s296
      %s298 = sphi 0, %s296
      %s299 = sphi 0, %s298
      %s313 = sphi 0, %s299
      %s317 = sphi 0, %s317
      %s319 = sphi 0, %s317
      %s320 = sphi 0, %s319
      %s334 = sphi 0, %s320
      %s338 = sphi 0, %s338
      %s340 = sphi 0, %s338
      %s341 = sphi 0, %s340
      %s355 = sphi 0, %s341
      %s359 = sphi 0, %s359
      %s361 = sphi 0, %s359
      %s362 = sphi 0, %s361
      %s376 = sphi 0, %s362
      %s380 = sphi 0, %s380
      %s382 = sphi 0, %s380
      %s383 = sphi 0, %s382
      %s397 = sphi 0, %s383
      %s405 = sphi 0, %s407
      %s408 = sphi 0, %s405
      %s409 = sphi 0, %s408
      %s425 = sphi 0, %s409
    $region4: #{tpu_custom_call.1} parent=1 // loop_header_branch
      %36 = sbr.rel (%p34) target = $region8
    $region5: #{tpu_custom_call.1} parent=1 // loop_body
      %s38 = ssub.s32 %s33, 1
      %s39 = ssub.s32 %s33, 2
      %s46 = sadd.s32 1, %s41
      %p47 = scmp.ge.s32.totalorder %s46, 1
      %s48 = scalar_select %p47, 0, %s46
      %s49 = sadd.s32 1, %s40
      %s50 = scalar_select %p47, %s49, %s40
      %p51 = scmp.ge.s32.totalorder %s50, 2
      %s52 = scalar_select %p51, 0, %s50
      %s53 = ssub.s32 %s40, %s52
      %s54 = ssub.s32 %s41, %s48
      %s55 = sor.u32 %s53, %s54
      %p56 = scmp.eq.s32.totalorder %s55, 0
      %s58 = sadd.s32 %s57, 1
      %s59 = scalar_select %p56, %s57, %s58
      %p62 = pneg %p56
      %p63 = scmp.eq.s32.totalorder %s33, 1
      %p64 = por %p62, %p63
      %p65 = scmp.ne.s32.totalorder %s57, %s60
      %p66 = scmp.eq.s32.totalorder %s33, 0
      %p67 = por %p65, %p66
      %p68 = scmp.ne.s32.totalorder %s57, %s60
      %p69 = scmp.eq.s32.totalorder %s38, 1
      %p70 = por %p68, %p69
      %p71 = scmp.ne.s32.totalorder %s60, %s61
      %p72 = scmp.eq.s32.totalorder %s38, 0
      %p73 = por %p71, %p72
      %p74 = scmp.ne.s32.totalorder %s60, %s61
      %p75 = scmp.eq.s32.totalorder %s39, 1
      %p76 = por %p74, %p75
      %p78 = scmp.ne.s32.totalorder %s61, %s77
      %p79 = scmp.eq.s32.totalorder %s39, 0
      %p80 = por %p78, %p79
      %s81 = ssub.s32 %s40, %s52
      %p82 = scmp.eq.s32.totalorder %s81, 0
      %s84 = sadd.s32 %s83, 1
      %s85 = scalar_select %p82, %s83, %s84
      %p88 = pneg %p82
      %p89 = scmp.eq.s32.totalorder %s33, 1
      %p90 = por %p88, %p89
      %p91 = scmp.ne.s32.totalorder %s83, %s86
      %p92 = scmp.eq.s32.totalorder %s33, 0
      %p93 = por %p91, %p92
      %p94 = scmp.ne.s32.totalorder %s83, %s86
      %p95 = scmp.eq.s32.totalorder %s38, 1
      %p96 = por %p94, %p95
      %p97 = scmp.ne.s32.totalorder %s86, %s87
      %p98 = scmp.eq.s32.totalorder %s38, 0
      %p99 = por %p97, %p98
      %p100 = scmp.ne.s32.totalorder %s86, %s87
      %p101 = scmp.eq.s32.totalorder %s39, 1
      %p102 = por %p100, %p101
      %p104 = scmp.ne.s32.totalorder %s87, %s103
      %p105 = scmp.eq.s32.totalorder %s39, 0
      %p106 = por %p104, %p105
      %s108 = sadd.s32 %s107, 1
      %p111 = scmp.eq.s32.totalorder %s33, 1
      %p112 = scmp.ne.s32.totalorder %s107, %s109
      %p113 = scmp.eq.s32.totalorder %s33, 0
      %p114 = por %p112, %p113
      %p115 = scmp.ne.s32.totalorder %s107, %s109
      %p116 = scmp.eq.s32.totalorder %s38, 1
      %p117 = por %p115, %p116
      %p118 = scmp.ne.s32.totalorder %s109, %s110
      %p119 = scmp.eq.s32.totalorder %s38, 0
      %p120 = por %p118, %p119
      %p121 = scmp.ne.s32.totalorder %s109, %s110
      %p122 = scmp.eq.s32.totalorder %s39, 1
      %p123 = por %p121, %p122
      %p125 = scmp.ne.s32.totalorder %s110, %s124
      %p126 = scmp.eq.s32.totalorder %s39, 0
      %p127 = por %p125, %p126
      %s129 = sadd.s32 %s128, 1
      %p132 = scmp.eq.s32.totalorder %s33, 1
      %p133 = scmp.ne.s32.totalorder %s128, %s130
      %p134 = scmp.eq.s32.totalorder %s33, 0
      %p135 = por %p133, %p134
      %p136 = scmp.ne.s32.totalorder %s128, %s130
      %p137 = scmp.eq.s32.totalorder %s38, 1
      %p138 = por %p136, %p137
      %p139 = scmp.ne.s32.totalorder %s130, %s131
      %p140 = scmp.eq.s32.totalorder %s38, 0
      %p141 = por %p139, %p140
      %p142 = scmp.ne.s32.totalorder %s130, %s131
      %p143 = scmp.eq.s32.totalorder %s39, 1
      %p144 = por %p142, %p143
      %p146 = scmp.ne.s32.totalorder %s131, %s145
      %p147 = scmp.eq.s32.totalorder %s39, 0
      %p148 = por %p146, %p147
      %s150 = sadd.s32 %s149, 1
      %p153 = scmp.eq.s32.totalorder %s33, 1
      %p154 = scmp.ne.s32.totalorder %s149, %s151
      %p155 = scmp.eq.s32.totalorder %s33, 0
      %p156 = por %p154, %p155
      %p157 = scmp.ne.s32.totalorder %s149, %s151
      %p158 = scmp.eq.s32.totalorder %s38, 1
      %p159 = por %p157, %p158
      %p160 = scmp.ne.s32.totalorder %s151, %s152
      %p161 = scmp.eq.s32.totalorder %s38, 0
      %p162 = por %p160, %p161
      %p163 = scmp.ne.s32.totalorder %s151, %s152
      %p164 = scmp.eq.s32.totalorder %s39, 1
      %p165 = por %p163, %p164
      %p167 = scmp.ne.s32.totalorder %s152, %s166
      %p168 = scmp.eq.s32.totalorder %s39, 0
      %p169 = por %p167, %p168
      %s171 = sadd.s32 %s170, 1
      %p174 = scmp.eq.s32.totalorder %s33, 1
      %p175 = scmp.ne.s32.totalorder %s170, %s172
      %p176 = scmp.eq.s32.totalorder %s33, 0
      %p177 = por %p175, %p176
      %p178 = scmp.ne.s32.totalorder %s170, %s172
      %p179 = scmp.eq.s32.totalorder %s38, 1
      %p180 = por %p178, %p179
      %p181 = scmp.ne.s32.totalorder %s172, %s173
      %p182 = scmp.eq.s32.totalorder %s38, 0
      %p183 = por %p181, %p182
      %p184 = scmp.ne.s32.totalorder %s172, %s173
      %p185 = scmp.eq.s32.totalorder %s39, 1
      %p186 = por %p184, %p185
      %p188 = scmp.ne.s32.totalorder %s173, %s187
      %p189 = scmp.eq.s32.totalorder %s39, 0
      %p190 = por %p188, %p189
      %s192 = sadd.s32 %s191, 1
      %p195 = scmp.eq.s32.totalorder %s33, 1
      %p196 = scmp.ne.s32.totalorder %s191, %s193
      %p197 = scmp.eq.s32.totalorder %s33, 0
      %p198 = por %p196, %p197
      %p199 = scmp.ne.s32.totalorder %s191, %s193
      %p200 = scmp.eq.s32.totalorder %s38, 1
      %p201 = por %p199, %p200
      %p202 = scmp.ne.s32.totalorder %s193, %s194
      %p203 = scmp.eq.s32.totalorder %s38, 0
      %p204 = por %p202, %p203
      %p205 = scmp.ne.s32.totalorder %s193, %s194
      %p206 = scmp.eq.s32.totalorder %s39, 1
      %p207 = por %p205, %p206
      %p209 = scmp.ne.s32.totalorder %s194, %s208
      %p210 = scmp.eq.s32.totalorder %s39, 0
      %p211 = por %p209, %p210
      %s213 = sadd.s32 %s212, 1
      %p216 = scmp.eq.s32.totalorder %s33, 1
      %p217 = scmp.ne.s32.totalorder %s212, %s214
      %p218 = scmp.eq.s32.totalorder %s33, 0
      %p219 = por %p217, %p218
      %p220 = scmp.ne.s32.totalorder %s212, %s214
      %p221 = scmp.eq.s32.totalorder %s38, 1
      %p222 = por %p220, %p221
      %p223 = scmp.ne.s32.totalorder %s214, %s215
      %p224 = scmp.eq.s32.totalorder %s38, 0
      %p225 = por %p223, %p224
      %p226 = scmp.ne.s32.totalorder %s214, %s215
      %p227 = scmp.eq.s32.totalorder %s39, 1
      %p228 = por %p226, %p227
      %p230 = scmp.ne.s32.totalorder %s215, %s229
      %p231 = scmp.eq.s32.totalorder %s39, 0
      %p232 = por %p230, %p231
      %s234 = sadd.s32 %s233, 1
      %p237 = scmp.eq.s32.totalorder %s33, 1
      %p238 = scmp.ne.s32.totalorder %s233, %s235
      %p239 = scmp.eq.s32.totalorder %s33, 0
      %p240 = por %p238, %p239
      %p241 = scmp.ne.s32.totalorder %s233, %s235
      %p242 = scmp.eq.s32.totalorder %s38, 1
      %p243 = por %p241, %p242
      %p244 = scmp.ne.s32.totalorder %s235, %s236
      %p245 = scmp.eq.s32.totalorder %s38, 0
      %p246 = por %p244, %p245
      %p247 = scmp.ne.s32.totalorder %s235, %s236
      %p248 = scmp.eq.s32.totalorder %s39, 1
      %p249 = por %p247, %p248
      %p251 = scmp.ne.s32.totalorder %s236, %s250
      %p252 = scmp.eq.s32.totalorder %s39, 0
      %p253 = por %p251, %p252
      %s255 = sadd.s32 %s254, 1
      %p258 = scmp.eq.s32.totalorder %s33, 1
      %p259 = scmp.ne.s32.totalorder %s254, %s256
      %p260 = scmp.eq.s32.totalorder %s33, 0
      %p261 = por %p259, %p260
      %p262 = scmp.ne.s32.totalorder %s254, %s256
      %p263 = scmp.eq.s32.totalorder %s38, 1
      %p264 = por %p262, %p263
      %p265 = scmp.ne.s32.totalorder %s256, %s257
      %p266 = scmp.eq.s32.totalorder %s38, 0
      %p267 = por %p265, %p266
      %p268 = scmp.ne.s32.totalorder %s256, %s257
      %p269 = scmp.eq.s32.totalorder %s39, 1
      %p270 = por %p268, %p269
      %p272 = scmp.ne.s32.totalorder %s257, %s271
      %p273 = scmp.eq.s32.totalorder %s39, 0
      %p274 = por %p272, %p273
      %s276 = sadd.s32 %s275, 1
      %p279 = scmp.eq.s32.totalorder %s33, 1
      %p280 = scmp.ne.s32.totalorder %s275, %s277
      %p281 = scmp.eq.s32.totalorder %s33, 0
      %p282 = por %p280, %p281
      %p283 = scmp.ne.s32.totalorder %s275, %s277
      %p284 = scmp.eq.s32.totalorder %s38, 1
      %p285 = por %p283, %p284
      %p286 = scmp.ne.s32.totalorder %s277, %s278
      %p287 = scmp.eq.s32.totalorder %s38, 0
      %p288 = por %p286, %p287
      %p289 = scmp.ne.s32.totalorder %s277, %s278
      %p290 = scmp.eq.s32.totalorder %s39, 1
      %p291 = por %p289, %p290
      %p293 = scmp.ne.s32.totalorder %s278, %s292
      %p294 = scmp.eq.s32.totalorder %s39, 0
      %p295 = por %p293, %p294
      %s297 = sadd.s32 %s296, 1
      %p300 = scmp.eq.s32.totalorder %s33, 1
      %p301 = scmp.ne.s32.totalorder %s296, %s298
      %p302 = scmp.eq.s32.totalorder %s33, 0
      %p303 = por %p301, %p302
      %p304 = scmp.ne.s32.totalorder %s296, %s298
      %p305 = scmp.eq.s32.totalorder %s38, 1
      %p306 = por %p304, %p305
      %p307 = scmp.ne.s32.totalorder %s298, %s299
      %p308 = scmp.eq.s32.totalorder %s38, 0
      %p309 = por %p307, %p308
      %p310 = scmp.ne.s32.totalorder %s298, %s299
      %p311 = scmp.eq.s32.totalorder %s39, 1
      %p312 = por %p310, %p311
      %p314 = scmp.ne.s32.totalorder %s299, %s313
      %p315 = scmp.eq.s32.totalorder %s39, 0
      %p316 = por %p314, %p315
      %s318 = sadd.s32 %s317, 1
      %p321 = scmp.eq.s32.totalorder %s33, 1
      %p322 = scmp.ne.s32.totalorder %s317, %s319
      %p323 = scmp.eq.s32.totalorder %s33, 0
      %p324 = por %p322, %p323
      %p325 = scmp.ne.s32.totalorder %s317, %s319
      %p326 = scmp.eq.s32.totalorder %s38, 1
      %p327 = por %p325, %p326
      %p328 = scmp.ne.s32.totalorder %s319, %s320
      %p329 = scmp.eq.s32.totalorder %s38, 0
      %p330 = por %p328, %p329
      %p331 = scmp.ne.s32.totalorder %s319, %s320
      %p332 = scmp.eq.s32.totalorder %s39, 1
      %p333 = por %p331, %p332
      %p335 = scmp.ne.s32.totalorder %s320, %s334
      %p336 = scmp.eq.s32.totalorder %s39, 0
      %p337 = por %p335, %p336
      %s339 = sadd.s32 %s338, 1
      %p342 = scmp.eq.s32.totalorder %s33, 1
      %p343 = scmp.ne.s32.totalorder %s338, %s340
      %p344 = scmp.eq.s32.totalorder %s33, 0
      %p345 = por %p343, %p344
      %p346 = scmp.ne.s32.totalorder %s338, %s340
      %p347 = scmp.eq.s32.totalorder %s38, 1
      %p348 = por %p346, %p347
      %p349 = scmp.ne.s32.totalorder %s340, %s341
      %p350 = scmp.eq.s32.totalorder %s38, 0
      %p351 = por %p349, %p350
      %p352 = scmp.ne.s32.totalorder %s340, %s341
      %p353 = scmp.eq.s32.totalorder %s39, 1
      %p354 = por %p352, %p353
      %p356 = scmp.ne.s32.totalorder %s341, %s355
      %p357 = scmp.eq.s32.totalorder %s39, 0
      %p358 = por %p356, %p357
      %s360 = sadd.s32 %s359, 1
      %p363 = scmp.eq.s32.totalorder %s33, 1
      %p364 = scmp.ne.s32.totalorder %s359, %s361
      %p365 = scmp.eq.s32.totalorder %s33, 0
      %p366 = por %p364, %p365
      %p367 = scmp.ne.s32.totalorder %s359, %s361
      %p368 = scmp.eq.s32.totalorder %s38, 1
      %p369 = por %p367, %p368
      %p370 = scmp.ne.s32.totalorder %s361, %s362
      %p371 = scmp.eq.s32.totalorder %s38, 0
      %p372 = por %p370, %p371
      %p373 = scmp.ne.s32.totalorder %s361, %s362
      %p374 = scmp.eq.s32.totalorder %s39, 1
      %p375 = por %p373, %p374
      %p377 = scmp.ne.s32.totalorder %s362, %s376
      %p378 = scmp.eq.s32.totalorder %s39, 0
      %p379 = por %p377, %p378
      %s381 = sadd.s32 %s380, 1
      %p384 = scmp.eq.s32.totalorder %s33, 1
      %p385 = scmp.ne.s32.totalorder %s380, %s382
      %p386 = scmp.eq.s32.totalorder %s33, 0
      %p387 = por %p385, %p386
      %p388 = scmp.ne.s32.totalorder %s380, %s382
      %p389 = scmp.eq.s32.totalorder %s38, 1
      %p390 = por %p388, %p389
      %p391 = scmp.ne.s32.totalorder %s382, %s383
      %p392 = scmp.eq.s32.totalorder %s38, 0
      %p393 = por %p391, %p392
      %p394 = scmp.ne.s32.totalorder %s382, %s383
      %p395 = scmp.eq.s32.totalorder %s39, 1
      %p396 = por %p394, %p395
      %p398 = scmp.ne.s32.totalorder %s383, %s397
      %p399 = scmp.eq.s32.totalorder %s39, 0
      %p400 = por %p398, %p399
      %s401 = ssub.s32 %s40, %s52
      %s402 = ssub.s32 %s41, %s48
      %s403 = sor.u32 %s401, %s402
      %p404 = scmp.eq.s32.totalorder %s403, 0
      %s406 = sadd.s32 %s405, 1
      %s407 = scalar_select %p404, %s405, %s406
      %p410 = pneg %p404
      %p411 = scmp.eq.s32.totalorder %s33, 1
      %p412 = por %p410, %p411
      %p413 = scmp.ne.s32.totalorder %s405, %s408
      %p414 = scmp.eq.s32.totalorder %s33, 0
      %p415 = por %p413, %p414
      %p416 = scmp.ne.s32.totalorder %s405, %s408
      %p417 = scmp.eq.s32.totalorder %s38, 1
      %p418 = por %p416, %p417
      %p419 = scmp.ne.s32.totalorder %s408, %s409
      %p420 = scmp.eq.s32.totalorder %s38, 0
      %p421 = por %p419, %p420
      %p422 = scmp.ne.s32.totalorder %s408, %s409
      %p423 = scmp.eq.s32.totalorder %s39, 1
      %p424 = por %p422, %p423
      %p426 = scmp.ne.s32.totalorder %s409, %s425
      %p427 = scmp.eq.s32.totalorder %s39, 0
      %p428 = por %p426, %p427
      %p429 = scmp.le.s32.totalorder 1, %s33
      %p430 = scmp.lt.s32.totalorder %s33, 3
      %p431 = pnand %p429, %p430
      %p432 = pneg %p431
      // Predicated region
      $region9: #{tpu_custom_call.1} parent=5 // pred_check
        _
      $region10: #{tpu_custom_call.1} parent=5 // pred_check_branch
        %434 = sbr.rel (%p431) target = $region12
      $region11: #{tpu_custom_call.1} parent=5 // pred_region
        %s435 = ssub.s32 %s33, 1
        // Predicated region
        $region13: #{tpu_custom_call.1} parent=11 // pred_check
          %p436 = pneg %p120
        $region14: #{tpu_custom_call.1} parent=11 // pred_check_branch
          %438 = sbr.rel (%p436) target = $region16
        $region15: #{tpu_custom_call.1} parent=11 // pred_region
          %s440 = ssub.s32 1024, 1024
          %441 = vsyncadd [#allocation7], %s440
          %s442 = sshll.u32 [#allocation8], 4
          %s443 = int_to_ptr.vmem [resolvable:$true] %s442
          %448 = dma.hbm_to_vmem [thread:$0]  %s2, 1024, %s443, [#allocation7], 64, 64, 4
        $region16: #{tpu_custom_call.1} parent=11 // pred_fallthru
          _
        // Predicated region
        $region17: #{tpu_custom_call.1} parent=11 // pred_check
          %p449 = pneg %p141
        $region18: #{tpu_custom_call.1} parent=11 // pred_check_branch
          %451 = sbr.rel (%p449) target = $region20
        $region19: #{tpu_custom_call.1} parent=11 // pred_region
          _
        $region20: #{tpu_custom_call.1} parent=11 // pred_fallthru
          _
        // Predicated region
        $region21: #{tpu_custom_call.1} parent=11 // pred_check
          %p452 = pneg %p162
        $region22: #{tpu_custom_call.1} parent=11 // pred_check_branch
          %454 = sbr.rel (%p452) target = $region24
        $region23: #{tpu_custom_call.1} parent=11 // pred_region
          %s456 = ssub.s32 2048, 2048
          %457 = vsyncadd [#allocation10], %s456
          %s458 = sshll.u32 [#allocation9], 4
          %s459 = int_to_ptr.vmem [resolvable:$true] %s458
          %464 = dma.hbm_to_vmem [thread:$0]  %s4, 2048, %s459, [#allocation10], 128, 128, 8
        $region24: #{tpu_custom_call.1} parent=11 // pred_fallthru
          _
        // Predicated region
        $region25: #{tpu_custom_call.1} parent=11 // pred_check
          %p465 = pneg %p183
        $region26: #{tpu_custom_call.1} parent=11 // pred_check_branch
          %467 = sbr.rel (%p465) target = $region28
        $region27: #{tpu_custom_call.1} parent=11 // pred_region
          _
        $region28: #{tpu_custom_call.1} parent=11 // pred_fallthru
          _
        // Predicated region
        $region29: #{tpu_custom_call.1} parent=11 // pred_check
          %p468 = pneg %p204
        $region30: #{tpu_custom_call.1} parent=11 // pred_check_branch
          %470 = sbr.rel (%p468) target = $region32
        $region31: #{tpu_custom_call.1} parent=11 // pred_region
          %s472 = ssub.s32 1024, 1024
          %473 = vsyncadd [#allocation10], %s472
          %s474 = sshll.u32 [#allocation11], 4
          %s475 = int_to_ptr.vmem [resolvable:$true] %s474
          %480 = dma.hbm_to_vmem [thread:$0]  %s6, 1024, %s475, [#allocation10], 64, 64, 4
        $region32: #{tpu_custom_call.1} parent=11 // pred_fallthru
          _
        // Predicated region
        $region33: #{tpu_custom_call.1} parent=11 // pred_check
          %p481 = pneg %p225
        $region34: #{tpu_custom_call.1} parent=11 // pred_check_branch
          %483 = sbr.rel (%p481) target = $region36
        $region35: #{tpu_custom_call.1} parent=11 // pred_region
          _
        $region36: #{tpu_custom_call.1} parent=11 // pred_fallthru
          _
        // Predicated region
        $region37: #{tpu_custom_call.1} parent=11 // pred_check
          %p484 = pneg %p246
        $region38: #{tpu_custom_call.1} parent=11 // pred_check_branch
          %486 = sbr.rel (%p484) target = $region40
        $region39: #{tpu_custom_call.1} parent=11 // pred_region
          %s488 = ssub.s32 2048, 2048
          %489 = vsyncadd [#allocation13], %s488
          %s490 = sshll.u32 [#allocation12], 4
          %s491 = int_to_ptr.vmem [resolvable:$true] %s490
          %496 = dma.hbm_to_vmem [thread:$0]  %s8, 2048, %s491, [#allocation13], 128, 128, 8
        $region40: #{tpu_custom_call.1} parent=11 // pred_fallthru
          _
        // Predicated region
        $region41: #{tpu_custom_call.1} parent=11 // pred_check
          %p497 = pneg %p267
        $region42: #{tpu_custom_call.1} parent=11 // pred_check_branch
          %499 = sbr.rel (%p497) target = $region44
        $region43: #{tpu_custom_call.1} parent=11 // pred_region
          _
        $region44: #{tpu_custom_call.1} parent=11 // pred_fallthru
          _
        // Predicated region
        $region45: #{tpu_custom_call.1} parent=11 // pred_check
          %p500 = pneg %p288
        $region46: #{tpu_custom_call.1} parent=11 // pred_check_branch
          %502 = sbr.rel (%p500) target = $region48
        $region47: #{tpu_custom_call.1} parent=11 // pred_region
          %s504 = ssub.s32 2048, 2048
          %505 = vsyncadd [#allocation13], %s504
          %s506 = sshll.u32 [#allocation14], 4
          %s507 = int_to_ptr.vmem [resolvable:$true] %s506
          %512 = dma.hbm_to_vmem [thread:$0]  %s10, 2048, %s507, [#allocation13], 64, 64, 4
        $region48: #{tpu_custom_call.1} parent=11 // pred_fallthru
          _
        // Predicated region
        $region49: #{tpu_custom_call.1} parent=11 // pred_check
          %p513 = pneg %p309
        $region50: #{tpu_custom_call.1} parent=11 // pred_check_branch
          %515 = sbr.rel (%p513) target = $region52
        $region51: #{tpu_custom_call.1} parent=11 // pred_region
          _
        $region52: #{tpu_custom_call.1} parent=11 // pred_fallthru
          _
        // Predicated region
        $region53: #{tpu_custom_call.1} parent=11 // pred_check
          %p516 = pneg %p330
        $region54: #{tpu_custom_call.1} parent=11 // pred_check_branch
          %518 = sbr.rel (%p516) target = $region56
        $region55: #{tpu_custom_call.1} parent=11 // pred_region
          _
        $region56: #{tpu_custom_call.1} parent=11 // pred_fallthru
          _
        // Predicated region
        $region57: #{tpu_custom_call.1} parent=11 // pred_check
          %p519 = pneg %p351
        $region58: #{tpu_custom_call.1} parent=11 // pred_check_branch
          %521 = sbr.rel (%p519) target = $region60
        $region59: #{tpu_custom_call.1} parent=11 // pred_region
          _
        $region60: #{tpu_custom_call.1} parent=11 // pred_fallthru
          _
        // Predicated region
        $region61: #{tpu_custom_call.1} parent=11 // pred_check
          %p522 = pneg %p372
        $region62: #{tpu_custom_call.1} parent=11 // pred_check_branch
          %524 = sbr.rel (%p522) target = $region64
        $region63: #{tpu_custom_call.1} parent=11 // pred_region
          _
        $region64: #{tpu_custom_call.1} parent=11 // pred_fallthru
          _
        // Predicated region
        $region65: #{tpu_custom_call.1} parent=11 // pred_check
          %p525 = pneg %p393
        $region66: #{tpu_custom_call.1} parent=11 // pred_check_branch
          %527 = sbr.rel (%p525) target = $region68
        $region67: #{tpu_custom_call.1} parent=11 // pred_region
          _
        $region68: #{tpu_custom_call.1} parent=11 // pred_fallthru
          _
      $region12: #{tpu_custom_call.1} parent=5 // pred_fallthru
        _
      %p528 = scmp.lt.s32.totalorder %s33, 2
      // Predicated region
      $region69: #{tpu_custom_call.1} parent=5 // pred_check
        %p529 = pneg %p528
      $region70: #{tpu_custom_call.1} parent=5 // pred_check_branch
        %531 = sbr.rel (%p529) target = $region72
      $region71: #{tpu_custom_call.1} parent=5 // pred_region
        // Predicated region
        $region73: #{tpu_custom_call.1} parent=71 // pred_check
          %p532 = pneg %p67
        $region74: #{tpu_custom_call.1} parent=71 // pred_check_branch
          %534 = sbr.rel (%p532) target = $region76
        $region75: #{tpu_custom_call.1} parent=71 // pred_region
          %s535 = sand.u32 %s57, 1
          %s536 = scalar_lea.sflag [#allocation4], %s535
          %s537 = sand.u32 %s57, 1
          %s538 = smul.addr %s537, 8
          %s539 = scalar_lea.vmem [#allocation3], %s538
          %s541 = ssub.s32 128, 128
          %542 = vsyncadd %s536, %s541
          %s543 = sadd.s32 %s41, %s40
          %s544 = smul.addr %s543, 128
          %s545 = scalar_lea.hbm %s0, %s544
          %s547 = sshll.u32 %s539, 4
          %s548 = int_to_ptr.vmem [resolvable:$true] %s547
          %550 = dma.hbm_to_vmem [thread:$0]  %s545, 128, %s548, %s536
        $region76: #{tpu_custom_call.1} parent=71 // pred_fallthru
          _
        // Predicated region
        $region77: #{tpu_custom_call.1} parent=71 // pred_check
          %p551 = pneg %p93
        $region78: #{tpu_custom_call.1} parent=71 // pred_check_branch
          %553 = sbr.rel (%p551) target = $region80
        $region79: #{tpu_custom_call.1} parent=71 // pred_region
          %s554 = sand.u32 %s33, 1
          %s555 = scalar_lea.sflag [#allocation7], %s554
          %s556 = sand.u32 %s83, 1
          %s557 = smul.addr %s556, 8
          %s558 = scalar_lea.vmem [#allocation6], %s557
          %s560 = ssub.s32 128, 128
          %561 = vsyncadd %s555, %s560
          %s562 = smul.addr %s40, 128
          %s563 = scalar_lea.hbm %s1, %s562
          %s565 = sshll.u32 %s558, 4
          %s566 = int_to_ptr.vmem [resolvable:$true] %s565
          %568 = dma.hbm_to_vmem [thread:$0]  %s563, 128, %s566, %s555
        $region80: #{tpu_custom_call.1} parent=71 // pred_fallthru
          _
      $region72: #{tpu_custom_call.1} parent=5 // pred_fallthru
        _
      %p569 = scmp.le.s32.totalorder 1, %s33
      %p570 = scmp.lt.s32.totalorder %s33, 3
      %p571 = pnand %p569, %p570
      %p572 = pneg %p571
      // Predicated region
      $region81: #{tpu_custom_call.1} parent=5 // pred_check
        _
      $region82: #{tpu_custom_call.1} parent=5 // pred_check_branch
        %574 = sbr.rel (%p571) target = $region84
      $region83: #{tpu_custom_call.1} parent=5 // pred_region
        %s575 = ssub.s32 %s33, 1
        %s576 = sand.u32 %s60, 1
        %s577 = scalar_lea.sflag [#allocation4], %s576
        %s578 = sand.u32 %s60, 1
        %s579 = smul.addr %s578, 8
        %s580 = scalar_lea.vmem [#allocation3], %s579
        // Predicated region
        $region85: #{tpu_custom_call.1} parent=83 // pred_check
          %p581 = pneg %p73
        $region86: #{tpu_custom_call.1} parent=83 // pred_check_branch
          %583 = sbr.rel (%p581) target = $region88
        $region87: #{tpu_custom_call.1} parent=83 // pred_region
          %584 = dma.done %s577, 128
        $region88: #{tpu_custom_call.1} parent=83 // pred_fallthru
          _
        %s585 = sand.u32 %s38, 1
        %s586 = scalar_lea.sflag [#allocation7], %s585
        %s587 = sand.u32 %s86, 1
        %s588 = smul.addr %s587, 8
        %s589 = scalar_lea.vmem [#allocation6], %s588
        // Predicated region
        $region89: #{tpu_custom_call.1} parent=83 // pred_check
          %p590 = pneg %p99
        $region90: #{tpu_custom_call.1} parent=83 // pred_check_branch
          %592 = sbr.rel (%p590) target = $region92
        $region91: #{tpu_custom_call.1} parent=83 // pred_region
          %593 = dma.done %s586, 128
        $region92: #{tpu_custom_call.1} parent=83 // pred_fallthru
          _
        // Predicated region
        $region93: #{tpu_custom_call.1} parent=83 // pred_check
          %p594 = pneg %p120
        $region94: #{tpu_custom_call.1} parent=83 // pred_check_branch
          %596 = sbr.rel (%p594) target = $region96
        $region95: #{tpu_custom_call.1} parent=83 // pred_region
          %597 = dma.done [#allocation7], 1024
        $region96: #{tpu_custom_call.1} parent=83 // pred_fallthru
          _
        // Predicated region
        $region97: #{tpu_custom_call.1} parent=83 // pred_check
          %p598 = pneg %p162
        $region98: #{tpu_custom_call.1} parent=83 // pred_check_branch
          %600 = sbr.rel (%p598) target = $region100
        $region99: #{tpu_custom_call.1} parent=83 // pred_region
          %601 = dma.done [#allocation10], 2048
        $region100: #{tpu_custom_call.1} parent=83 // pred_fallthru
          _
        // Predicated region
        $region101: #{tpu_custom_call.1} parent=83 // pred_check
          %p602 = pneg %p204
        $region102: #{tpu_custom_call.1} parent=83 // pred_check_branch
          %604 = sbr.rel (%p602) target = $region104
        $region103: #{tpu_custom_call.1} parent=83 // pred_region
          %605 = dma.done [#allocation10], 1024
        $region104: #{tpu_custom_call.1} parent=83 // pred_fallthru
          _
        // Predicated region
        $region105: #{tpu_custom_call.1} parent=83 // pred_check
          %p606 = pneg %p246
        $region106: #{tpu_custom_call.1} parent=83 // pred_check_branch
          %608 = sbr.rel (%p606) target = $region108
        $region107: #{tpu_custom_call.1} parent=83 // pred_region
          %609 = dma.done [#allocation13], 2048
        $region108: #{tpu_custom_call.1} parent=83 // pred_fallthru
          _
        // Predicated region
        $region109: #{tpu_custom_call.1} parent=83 // pred_check
          %p610 = pneg %p288
        $region110: #{tpu_custom_call.1} parent=83 // pred_check_branch
          %612 = sbr.rel (%p610) target = $region112
        $region111: #{tpu_custom_call.1} parent=83 // pred_region
          %613 = dma.done [#allocation13], 2048
        $region112: #{tpu_custom_call.1} parent=83 // pred_fallthru
          _
        %s614 = sand.u32 %s60, 1
        %s615 = scalar_lea.sflag [#allocation4], %s614
        %s616 = sand.u32 %s60, 1
        %s617 = smul.addr %s616, 8
        %s618 = scalar_lea.vmem [#allocation3], %s617
        %p619 = pneg %p73
        %p620 = pneg %p70
        %s621 = sand.u32 %s38, 1
        %s622 = scalar_lea.sflag [#allocation7], %s621
        %s623 = sand.u32 %s86, 1
        %s624 = smul.addr %s623, 8
        %s625 = scalar_lea.vmem [#allocation6], %s624
        %p626 = pneg %p99
        %p627 = pneg %p96
        %p628 = pneg %p120
        %p629 = pneg %p117
        %p630 = pneg %p141
        %p631 = pneg %p138
        %p632 = pneg %p162
        %p633 = pneg %p159
        %p634 = pneg %p183
        %p635 = pneg %p180
        %p636 = pneg %p204
        %p637 = pneg %p201
        %p638 = pneg %p225
        %p639 = pneg %p222
        %p640 = pneg %p246
        %p641 = pneg %p243
        %p642 = pneg %p267
        %p643 = pneg %p264
        %p644 = pneg %p288
        %p645 = pneg %p285
        %p646 = pneg %p309
        %p647 = pneg %p306
        %p648 = pneg %p330
        %p649 = pneg %p327
        %p650 = pneg %p351
        %p651 = pneg %p348
        %p652 = pneg %p372
        %p653 = pneg %p369
        %p654 = pneg %p393
        %p655 = pneg %p390
        %p656 = pneg %p421
        %p657 = pneg %p418
        %s658 = sand.u32 %s408, 1
        %s659 = scalar_lea.sflag [#allocation5], %s658
        %s660 = sand.u32 %s408, 1
        %s661 = smul.addr %s660, 8
        %s662 = scalar_lea.vmem [#allocation15], %s661
        %v664 = vld [vmem:[%s580] sm:$0xff]
        %v665 = vpack.c.bf16 %v664, %v664
        %v666 = vld [vmem:[%s589] sm:$0xff]
        %v667 = vpack.c.bf16 %v666, %v666
        %v668 = vld [vmem:[#allocation8] sm:$0xf]
        %v669 = vld [vmem:[#allocation8 + $0x4] sm:$0xf]
        %v670 = vld [vmem:[#allocation8 + $0x8] sm:$0xf]
        %v671 = vld [vmem:[#allocation8 + $0xc] sm:$0xf]
        %v672 = vld [vmem:[#allocation8 + $0x10] sm:$0xf]
        %v673 = vld [vmem:[#allocation8 + $0x14] sm:$0xf]
        %v674 = vld [vmem:[#allocation8 + $0x18] sm:$0xf]
        %v675 = vld [vmem:[#allocation8 + $0x1c] sm:$0xf]
        %v676 = vld [vmem:[#allocation8 + $0x20] sm:$0xf]
        %v677 = vld [vmem:[#allocation8 + $0x24] sm:$0xf]
        %v678 = vld [vmem:[#allocation8 + $0x28] sm:$0xf]
        %v679 = vld [vmem:[#allocation8 + $0x2c] sm:$0xf]
        %v680 = vld [vmem:[#allocation8 + $0x30] sm:$0xf]
        %v681 = vld [vmem:[#allocation8 + $0x34] sm:$0xf]
        %v682 = vld [vmem:[#allocation8 + $0x38] sm:$0xf]
        %v683 = vld [vmem:[#allocation8 + $0x3c] sm:$0xf]
        %v684 = vld [vmem:[%s3] sm:$0x1]
        %v686 = vlaneseq
        %v687 = vshrl.u32 %v686, 7
        %v688 = vsub.s32 0, %v687
        %v689 = vrot.slane %v684, %v688
        %v707 = vunpack.c.l.b16 %v668
        %v708 = vunpack.c.l.b16 %v669
        %v709 = vunpack.c.l.b16 %v670
        %v710 = vunpack.c.l.b16 %v671
        %v711 = vunpack.c.l.b16 %v672
        %v712 = vunpack.c.l.b16 %v673
        %v713 = vunpack.c.l.b16 %v674
        %v714 = vunpack.c.l.b16 %v675
        %v715 = vunpack.c.l.b16 %v676
        %v716 = vunpack.c.l.b16 %v677
        %v717 = vunpack.c.l.b16 %v678
        %v718 = vunpack.c.l.b16 %v679
        %v719 = vunpack.c.l.b16 %v680
        %v720 = vunpack.c.l.b16 %v681
        %v721 = vunpack.c.l.b16 %v682
        %v722 = vunpack.c.l.b16 %v683
        %v723 = vpack.c.b16 %v708, %v707
        %v724 = vpack.c.b16 %v710, %v709
        %v725 = vpack.c.b16 %v712, %v711
        %v726 = vpack.c.b16 %v714, %v713
        %v727 = vpack.c.b16 %v716, %v715
        %v728 = vpack.c.b16 %v718, %v717
        %v729 = vpack.c.b16 %v720, %v719
        %v730 = vpack.c.b16 %v722, %v721
        %739 = vmatprep.subr.bf16.mxu0 0
        %740 = vmatpush1.bf16.msra.mxu0 %v723
        %741 = vmatprep.subr.bf16.mxu0 0
        %742 = vmatpush1.bf16.msra.mxu0 %v724
        %743 = vmatprep.subr.bf16.mxu0 0
        %744 = vmatpush1.bf16.msra.mxu0 %v725
        %745 = vmatprep.subr.bf16.mxu0 0
        %746 = vmatpush1.bf16.msra.mxu0 %v726
        %747 = vmatprep.subr.bf16.mxu0 0
        %748 = vmatpush1.bf16.msra.mxu0 %v727
        %749 = vmatprep.subr.bf16.mxu0 0
        %750 = vmatpush1.bf16.msra.mxu0 %v728
        %751 = vmatprep.subr.bf16.mxu0 0
        %752 = vmatpush1.bf16.msra.mxu0 %v729
        %753 = vmatprep.subr.bf16.mxu0 0
        %754 = vmatpush1.bf16.msra.mxu0 %v730
        %755 = vmatprep.subr.bf16.mxu0 0
        %756 = vmatpush1.bf16.msra.mxu0 0
        %757 = vmatprep.subr.bf16.mxu0 0
        %758 = vmatpush1.bf16.msra.mxu0 0
        %759 = vmatprep.subr.bf16.mxu0 0
        %760 = vmatpush1.bf16.msra.mxu0 0
        %761 = vmatprep.subr.bf16.mxu0 0
        %762 = vmatpush1.bf16.msra.mxu0 0
        %763 = vmatprep.subr.bf16.mxu0 0
        %764 = vmatpush1.bf16.msra.mxu0 0
        %765 = vmatprep.subr.bf16.mxu0 0
        %766 = vmatpush1.bf16.msra.mxu0 0
        %767 = vmatprep.subr.bf16.mxu0 0
        %768 = vmatpush1.bf16.msra.mxu0 0
        %769 = vmatprep.subr.bf16.mxu0 0
        %770 = vmatpush1.bf16.msra.mxu0 0
        %771 = vmatprep.mubr.bf16.mxu0 0
        %772 = vmatmul.mubr.bf16.gmra.mrb[0].mxu0 %v665
        %v773 = vpop.f32.mrb[0].mxu0
        %v774 = vadd.f32 %v689, %v773
        %v775 = vpop.f32.mrb[0].mxu0
        %v776 = vpop.f32.mrb[0].mxu0
        %v777 = vpop.f32.mrb[0].mxu0
        %778 = vdwg.mxu0
        %v779 = vpack.c.bf16 %v774, %v774
        %v780 = vld [vmem:[#allocation9] sm:$0xff]
        %v781 = vld [vmem:[#allocation9 + $0x8] sm:$0xff]
        %v782 = vld [vmem:[#allocation9 + $0x10] sm:$0xff]
        %v783 = vld [vmem:[#allocation9 + $0x18] sm:$0xff]
        %v784 = vld [vmem:[#allocation9 + $0x20] sm:$0xff]
        %v785 = vld [vmem:[#allocation9 + $0x28] sm:$0xff]
        %v786 = vld [vmem:[#allocation9 + $0x30] sm:$0xff]
        %v787 = vld [vmem:[#allocation9 + $0x38] sm:$0xff]
        %v788 = vld [vmem:[#allocation9 + $0x40] sm:$0xff]
        %v789 = vld [vmem:[#allocation9 + $0x48] sm:$0xff]
        %v790 = vld [vmem:[#allocation9 + $0x50] sm:$0xff]
        %v791 = vld [vmem:[#allocation9 + $0x58] sm:$0xff]
        %v792 = vld [vmem:[#allocation9 + $0x60] sm:$0xff]
        %v793 = vld [vmem:[#allocation9 + $0x68] sm:$0xff]
        %v794 = vld [vmem:[#allocation9 + $0x70] sm:$0xff]
        %v795 = vld [vmem:[#allocation9 + $0x78] sm:$0xff]
        %v796 = vld [vmem:[%s5] sm:$0x3]
        %v798 = vlaneseq
        %v799 = vshrl.u32 %v798, 7
        %v800 = vsub.s32 0, %v799
        %v801 = vrot.slane %v796, %v800
        %v802 = vlaneseq
        %v803 = vshrl.u32 %v802, 7
        %v804 = vsub.s32 1, %v803
        %v805 = vrot.slane %v796, %v804
        %v824 = vunpack.c.l.b16 %v780
        %v825 = vunpack.c.h.b16 %v780
        %v826 = vunpack.c.l.b16 %v781
        %v827 = vunpack.c.h.b16 %v781
        %v828 = vunpack.c.l.b16 %v782
        %v829 = vunpack.c.h.b16 %v782
        %v830 = vunpack.c.l.b16 %v783
        %v831 = vunpack.c.h.b16 %v783
        %v832 = vunpack.c.l.b16 %v784
        %v833 = vunpack.c.h.b16 %v784
        %v834 = vunpack.c.l.b16 %v785
        %v835 = vunpack.c.h.b16 %v785
        %v836 = vunpack.c.l.b16 %v786
        %v837 = vunpack.c.h.b16 %v786
        %v838 = vunpack.c.l.b16 %v787
        %v839 = vunpack.c.h.b16 %v787
        %v840 = vunpack.c.l.b16 %v788
        %v841 = vunpack.c.h.b16 %v788
        %v842 = vunpack.c.l.b16 %v789
        %v843 = vunpack.c.h.b16 %v789
        %v844 = vunpack.c.l.b16 %v790
        %v845 = vunpack.c.h.b16 %v790
        %v846 = vunpack.c.l.b16 %v791
        %v847 = vunpack.c.h.b16 %v791
        %v848 = vunpack.c.l.b16 %v792
        %v849 = vunpack.c.h.b16 %v792
        %v850 = vunpack.c.l.b16 %v793
        %v851 = vunpack.c.h.b16 %v793
        %v852 = vunpack.c.l.b16 %v794
        %v853 = vunpack.c.h.b16 %v794
        %v854 = vunpack.c.l.b16 %v795
        %v855 = vunpack.c.h.b16 %v795
        %v856 = vpack.c.b16 %v826, %v824
        %v857 = vpack.c.b16 %v827, %v825
        %v858 = vpack.c.b16 %v830, %v828
        %v859 = vpack.c.b16 %v831, %v829
        %v860 = vpack.c.b16 %v834, %v832
        %v861 = vpack.c.b16 %v835, %v833
        %v862 = vpack.c.b16 %v838, %v836
        %v863 = vpack.c.b16 %v839, %v837
        %v864 = vpack.c.b16 %v842, %v840
        %v865 = vpack.c.b16 %v843, %v841
        %v866 = vpack.c.b16 %v846, %v844
        %v867 = vpack.c.b16 %v847, %v845
        %v868 = vpack.c.b16 %v850, %v848
        %v869 = vpack.c.b16 %v851, %v849
        %v870 = vpack.c.b16 %v854, %v852
        %v871 = vpack.c.b16 %v855, %v853
        %888 = vmatprep.subr.bf16.mxu0 %v857
        %889 = vmatpush1.bf16.msra.mxu0 %v856
        %890 = vmatprep.subr.bf16.mxu0 %v859
        %891 = vmatpush1.bf16.msra.mxu0 %v858
        %892 = vmatprep.subr.bf16.mxu0 %v861
        %893 = vmatpush1.bf16.msra.mxu0 %v860
        %894 = vmatprep.subr.bf16.mxu0 %v863
        %895 = vmatpush1.bf16.msra.mxu0 %v862
        %896 = vmatprep.subr.bf16.mxu0 %v865
        %897 = vmatpush1.bf16.msra.mxu0 %v864
        %898 = vmatprep.subr.bf16.mxu0 %v867
        %899 = vmatpush1.bf16.msra.mxu0 %v866
        %900 = vmatprep.subr.bf16.mxu0 %v869
        %901 = vmatpush1.bf16.msra.mxu0 %v868
        %902 = vmatprep.subr.bf16.mxu0 %v871
        %903 = vmatpush1.bf16.msra.mxu0 %v870
        %904 = vmatprep.subr.bf16.mxu0 0
        %905 = vmatpush1.bf16.msra.mxu0 0
        %906 = vmatprep.subr.bf16.mxu0 0
        %907 = vmatpush1.bf16.msra.mxu0 0
        %908 = vmatprep.subr.bf16.mxu0 0
        %909 = vmatpush1.bf16.msra.mxu0 0
        %910 = vmatprep.subr.bf16.mxu0 0
        %911 = vmatpush1.bf16.msra.mxu0 0
        %912 = vmatprep.subr.bf16.mxu0 0
        %913 = vmatpush1.bf16.msra.mxu0 0
        %914 = vmatprep.subr.bf16.mxu0 0
        %915 = vmatpush1.bf16.msra.mxu0 0
        %916 = vmatprep.subr.bf16.mxu0 0
        %917 = vmatpush1.bf16.msra.mxu0 0
        %918 = vmatprep.subr.bf16.mxu0 0
        %919 = vmatpush1.bf16.msra.mxu0 0
        %920 = vmatprep.mubr.bf16.mxu0 0
        %921 = vmatmul.mubr.bf16.gmra.mrb[0].mxu0 %v667
        %v922 = vpop.f32.mrb[0].mxu0
        %v923 = vadd.f32 %v801, %v922
        %v924 = vpop.f32.mrb[0].mxu0
        %v925 = vadd.f32 %v805, %v924
        %v926 = vpop.f32.mrb[0].mxu0
        %v927 = vpop.f32.mrb[0].mxu0
        %928 = vdwg.mxu0
        %v929 = vpack.c.bf16 %v923, %v923
        %v930 = vpack.c.bf16 %v925, %v925
        %vm931 = vcmask 261120
        %v933 = vsel %vm931, %v779, 0
        %v936 = vsel %vm931, %v929, 0
        %938 = vmatprep.subr.bf16.mxu0 0
        %939 = vmatpush1.bf16.xpose.msra.mxu0 %v936
        %940 = vmatprep.subr.bf16.mxu0 0
        %941 = vmatpush1.bf16.xpose.msra.mxu0 0
        %942 = vmatprep.subr.bf16.mxu0 0
        %943 = vmatpush1.bf16.xpose.msra.mxu0 0
        %944 = vmatprep.subr.bf16.mxu0 0
        %945 = vmatpush1.bf16.xpose.msra.mxu0 0
        %946 = vmatprep.subr.bf16.mxu0 0
        %947 = vmatpush1.bf16.xpose.msra.mxu0 0
        %948 = vmatprep.subr.bf16.mxu0 0
        %949 = vmatpush1.bf16.xpose.msra.mxu0 0
        %950 = vmatprep.subr.bf16.mxu0 0
        %951 = vmatpush1.bf16.xpose.msra.mxu0 0
        %952 = vmatprep.subr.bf16.mxu0 0
        %953 = vmatpush1.bf16.xpose.msra.mxu0 0
        %954 = vmatprep.subr.bf16.mxu0 0
        %955 = vmatpush1.bf16.xpose.msra.mxu0 0
        %956 = vmatprep.subr.bf16.mxu0 0
        %957 = vmatpush1.bf16.xpose.msra.mxu0 0
        %958 = vmatprep.subr.bf16.mxu0 0
        %959 = vmatpush1.bf16.xpose.msra.mxu0 0
        %960 = vmatprep.subr.bf16.mxu0 0
        %961 = vmatpush1.bf16.xpose.msra.mxu0 0
        %962 = vmatprep.subr.bf16.mxu0 0
        %963 = vmatpush1.bf16.xpose.msra.mxu0 0
        %964 = vmatprep.subr.bf16.mxu0 0
        %965 = vmatpush1.bf16.xpose.msra.mxu0 0
        %966 = vmatprep.subr.bf16.mxu0 0
        %967 = vmatpush1.bf16.xpose.msra.mxu0 0
        %968 = vmatprep.subr.bf16.mxu0 0
        %969 = vmatpush1.bf16.xpose.msra.mxu0 0
        %970 = vmatprep.mubr.bf16.mxu0 0
        %971 = vmatmul.mubr.bf16.gmra.mrb[0].mxu0 %v933
        %v972 = vpop.f32.mrb[0].mxu0
        %v973 = vadd.f32 0.0, %v972
        %v974 = vpop.f32.mrb[0].mxu0
        %v975 = vpop.f32.mrb[0].mxu0
        %v976 = vpop.f32.mrb[0].mxu0
        %977 = vdwg.mxu0
        %vm978 = vcmask 64512
        %v979 = vsel %vm978, %v973, -inf
        %980 = vmax.xlane.f32.xlu0 %v979
        %v981 = vpop.xlane.xlu0 %980
        %v982 = vsub.f32 %v973, %v981
        %v983 = vmul.f32 %v982, 1.442695
        %v984 = vpow.pop %v983
        %v985 = vsel %vm978, %v984, 0.0
        %986 = vadd.xlane.f32.xlu0 %v985
        %v987 = vpop.xlane.xlu0 %986
        %v988 = vrcp.pop %v987
        %v989 = vmul.f32 %v984, %v988
        %v990 = vpack.c.bf16 %v989, %v989
        %v992 = vsel %vm978, %v990, 0
        %vm994 = vcmask 1043456
        %v996 = vsel %vm994, %v930, 0
        %998 = vmatprep.subr.bf16.mxu0 0
        %999 = vmatpush1.bf16.msra.mxu0 %v996
        %1000 = vmatprep.subr.bf16.mxu0 0
        %1001 = vmatpush1.bf16.msra.mxu0 0
        %1002 = vmatprep.subr.bf16.mxu0 0
        %1003 = vmatpush1.bf16.msra.mxu0 0
        %1004 = vmatprep.subr.bf16.mxu0 0
        %1005 = vmatpush1.bf16.msra.mxu0 0
        %1006 = vmatprep.subr.bf16.mxu0 0
        %1007 = vmatpush1.bf16.msra.mxu0 0
        %1008 = vmatprep.subr.bf16.mxu0 0
        %1009 = vmatpush1.bf16.msra.mxu0 0
        %1010 = vmatprep.subr.bf16.mxu0 0
        %1011 = vmatpush1.bf16.msra.mxu0 0
        %1012 = vmatprep.subr.bf16.mxu0 0
        %1013 = vmatpush1.bf16.msra.mxu0 0
        %1014 = vmatprep.subr.bf16.mxu0 0
        %1015 = vmatpush1.bf16.msra.mxu0 0
        %1016 = vmatprep.subr.bf16.mxu0 0
        %1017 = vmatpush1.bf16.msra.mxu0 0
        %1018 = vmatprep.subr.bf16.mxu0 0
        %1019 = vmatpush1.bf16.msra.mxu0 0
        %1020 = vmatprep.subr.bf16.mxu0 0
        %1021 = vmatpush1.bf16.msra.mxu0 0
        %1022 = vmatprep.subr.bf16.mxu0 0
        %1023 = vmatpush1.bf16.msra.mxu0 0
        %1024 = vmatprep.subr.bf16.mxu0 0
        %1025 = vmatpush1.bf16.msra.mxu0 0
        %1026 = vmatprep.subr.bf16.mxu0 0
        %1027 = vmatpush1.bf16.msra.mxu0 0
        %1028 = vmatprep.subr.bf16.mxu0 0
        %1029 = vmatpush1.bf16.msra.mxu0 0
        %1030 = vmatprep.mubr.bf16.mxu0 0
        %1031 = vmatmul.mubr.bf16.gmra.mrb[0].mxu0 %v992
        %v1032 = vpop.f32.mrb[0].mxu0
        %v1033 = vadd.f32 0.0, %v1032
        %v1034 = vpop.f32.mrb[0].mxu0
        %v1035 = vpop.f32.mrb[0].mxu0
        %v1036 = vpop.f32.mrb[0].mxu0
        %1037 = vdwg.mxu0
        %v1038 = vpack.c.bf16 %v1033, %v1033
        %vm1039 = vcmask 257024
        %1040 = vst.msk [vmem:[#allocation2] sm:$0xf] %vm1039, %v1038
        %1042 = vrot.lane.b32.xlu0 %v779, 96
        %v1043 = vpop.permute.xlu0 %1042
        %1045 = vrot.lane.b32.xlu0 %v929, 96
        %v1046 = vpop.permute.xlu0 %1045
        %v1048 = vsel %vm931, %v1043, 0
        %v1051 = vsel %vm931, %v1046, 0
        %1053 = vmatprep.subr.bf16.mxu0 0
        %1054 = vmatpush1.bf16.xpose.msra.mxu0 %v1051
        %1055 = vmatprep.subr.bf16.mxu0 0
        %1056 = vmatpush1.bf16.xpose.msra.mxu0 0
        %1057 = vmatprep.subr.bf16.mxu0 0
        %1058 = vmatpush1.bf16.xpose.msra.mxu0 0
        %1059 = vmatprep.subr.bf16.mxu0 0
        %1060 = vmatpush1.bf16.xpose.msra.mxu0 0
        %1061 = vmatprep.subr.bf16.mxu0 0
        %1062 = vmatpush1.bf16.xpose.msra.mxu0 0
        %1063 = vmatprep.subr.bf16.mxu0 0
        %1064 = vmatpush1.bf16.xpose.msra.mxu0 0
        %1065 = vmatprep.subr.bf16.mxu0 0
        %1066 = vmatpush1.bf16.xpose.msra.mxu0 0
        %1067 = vmatprep.subr.bf16.mxu0 0
        %1068 = vmatpush1.bf16.xpose.msra.mxu0 0
        %1069 = vmatprep.subr.bf16.mxu0 0
        %1070 = vmatpush1.bf16.xpose.msra.mxu0 0
        %1071 = vmatprep.subr.bf16.mxu0 0
        %1072 = vmatpush1.bf16.xpose.msra.mxu0 0
        %1073 = vmatprep.subr.bf16.mxu0 0
        %1074 = vmatpush1.bf16.xpose.msra.mxu0 0
        %1075 = vmatprep.subr.bf16.mxu0 0
        %1076 = vmatpush1.bf16.xpose.msra.mxu0 0
        %1077 = vmatprep.subr.bf16.mxu0 0
        %1078 = vmatpush1.bf16.xpose.msra.mxu0 0
        %1079 = vmatprep.subr.bf16.mxu0 0
        %1080 = vmatpush1.bf16.xpose.msra.mxu0 0
        %1081 = vmatprep.subr.bf16.mxu0 0
        %1082 = vmatpush1.bf16.xpose.msra.mxu0 0
        %1083 = vmatprep.subr.bf16.mxu0 0
        %1084 = vmatpush1.bf16.xpose.msra.mxu0 0
        %1085 = vmatprep.mubr.bf16.mxu0 0
        %1086 = vmatmul.mubr.bf16.gmra.mrb[0].mxu0 %v1048
        %v1087 = vpop.f32.mrb[0].mxu0
        %v1088 = vadd.f32 0.0, %v1087
        %v1089 = vpop.f32.mrb[0].mxu0
        %v1090 = vpop.f32.mrb[0].mxu0
        %v1091 = vpop.f32.mrb[0].mxu0
        %1092 = vdwg.mxu0
        %v1093 = vsel %vm978, %v1088, -inf
        %1094 = vmax.xlane.f32.xlu0 %v1093
        %v1095 = vpop.xlane.xlu0 %1094
        %v1096 = vsub.f32 %v1088, %v1095
        %v1097 = vmul.f32 %v1096, 1.442695
        %v1098 = vpow.pop %v1097
        %v1099 = vsel %vm978, %v1098, 0.0
        %1100 = vadd.xlane.f32.xlu0 %v1099
        %v1101 = vpop.xlane.xlu0 %1100
        %v1102 = vrcp.pop %v1101
        %v1103 = vmul.f32 %v1098, %v1102
        %v1104 = vpack.c.bf16 %v1103, %v1103
        %1106 = vrot.lane.b32.xlu0 %v930, 96
        %v1107 = vpop.permute.xlu0 %1106
        %v1109 = vsel %vm978, %v1104, 0
        %v1112 = vsel %vm994, %v1107, 0
        %1114 = vmatprep.subr.bf16.mxu0 0
        %1115 = vmatpush1.bf16.msra.mxu0 %v1112
        %1116 = vmatprep.subr.bf16.mxu0 0
        %1117 = vmatpush1.bf16.msra.mxu0 0
        %1118 = vmatprep.subr.bf16.mxu0 0
        %1119 = vmatpush1.bf16.msra.mxu0 0
        %1120 = vmatprep.subr.bf16.mxu0 0
        %1121 = vmatpush1.bf16.msra.mxu0 0
        %1122 = vmatprep.subr.bf16.mxu0 0
        %1123 = vmatpush1.bf16.msra.mxu0 0
        %1124 = vmatprep.subr.bf16.mxu0 0
        %1125 = vmatpush1.bf16.msra.mxu0 0
        %1126 = vmatprep.subr.bf16.mxu0 0
        %1127 = vmatpush1.bf16.msra.mxu0 0
        %1128 = vmatprep.subr.bf16.mxu0 0
        %1129 = vmatpush1.bf16.msra.mxu0 0
        %1130 = vmatprep.subr.bf16.mxu0 0
        %1131 = vmatpush1.bf16.msra.mxu0 0
        %1132 = vmatprep.subr.bf16.mxu0 0
        %1133 = vmatpush1.bf16.msra.mxu0 0
        %1134 = vmatprep.subr.bf16.mxu0 0
        %1135 = vmatpush1.bf16.msra.mxu0 0
        %1136 = vmatprep.subr.bf16.mxu0 0
        %1137 = vmatpush1.bf16.msra.mxu0 0
        %1138 = vmatprep.subr.bf16.mxu0 0
        %1139 = vmatpush1.bf16.msra.mxu0 0
        %1140 = vmatprep.subr.bf16.mxu0 0
        %1141 = vmatpush1.bf16.msra.mxu0 0
        %1142 = vmatprep.subr.bf16.mxu0 0
        %1143 = vmatpush1.bf16.msra.mxu0 0
        %1144 = vmatprep.subr.bf16.mxu0 0
        %1145 = vmatpush1.bf16.msra.mxu0 0
        %1146 = vmatprep.mubr.bf16.mxu0 0
        %1147 = vmatmul.mubr.bf16.gmra.mrb[0].mxu0 %v1109
        %v1148 = vpop.f32.mrb[0].mxu0
        %v1149 = vadd.f32 0.0, %v1148
        %v1150 = vpop.f32.mrb[0].mxu0
        %v1151 = vpop.f32.mrb[0].mxu0
        %v1152 = vpop.f32.mrb[0].mxu0
        %1153 = vdwg.mxu0
        %v1154 = vpack.c.bf16 %v1149, %v1149
        %v1156 = vunpack.c.l.b16 %v1154
        %v1157 = vpack.c.b16 %v1156, %v1156
        %1158 = vrot.lane.b32.xlu0 %v1157, 32
        %v1159 = vpop.permute.xlu0 %1158
        %vm1161 = vcmask 519424
        %1162 = vst.msk [vmem:[#allocation2] sm:$0xf] %vm1161, %v1159
        %1163 = vrot.lane.b32.xlu0 %v779, 64
        %v1164 = vpop.permute.xlu0 %1163
        %1165 = vrot.lane.b32.xlu0 %v929, 64
        %v1166 = vpop.permute.xlu0 %1165
        %v1168 = vsel %vm931, %v1164, 0
        %v1171 = vsel %vm931, %v1166, 0
        %1173 = vmatprep.subr.bf16.mxu0 0
        %1174 = vmatpush1.bf16.xpose.msra.mxu0 %v1171
        %1175 = vmatprep.subr.bf16.mxu0 0
        %1176 = vmatpush1.bf16.xpose.msra.mxu0 0
        %1177 = vmatprep.subr.bf16.mxu0 0
        %1178 = vmatpush1.bf16.xpose.msra.mxu0 0
        %1179 = vmatprep.subr.bf16.mxu0 0
        %1180 = vmatpush1.bf16.xpose.msra.mxu0 0
        %1181 = vmatprep.subr.bf16.mxu0 0
        %1182 = vmatpush1.bf16.xpose.msra.mxu0 0
        %1183 = vmatprep.subr.bf16.mxu0 0
        %1184 = vmatpush1.bf16.xpose.msra.mxu0 0
        %1185 = vmatprep.subr.bf16.mxu0 0
        %1186 = vmatpush1.bf16.xpose.msra.mxu0 0
        %1187 = vmatprep.subr.bf16.mxu0 0
        %1188 = vmatpush1.bf16.xpose.msra.mxu0 0
        %1189 = vmatprep.subr.bf16.mxu0 0
        %1190 = vmatpush1.bf16.xpose.msra.mxu0 0
        %1191 = vmatprep.subr.bf16.mxu0 0
        %1192 = vmatpush1.bf16.xpose.msra.mxu0 0
        %1193 = vmatprep.subr.bf16.mxu0 0
        %1194 = vmatpush1.bf16.xpose.msra.mxu0 0
        %1195 = vmatprep.subr.bf16.mxu0 0
        %1196 = vmatpush1.bf16.xpose.msra.mxu0 0
        %1197 = vmatprep.subr.bf16.mxu0 0
        %1198 = vmatpush1.bf16.xpose.msra.mxu0 0
        %1199 = vmatprep.subr.bf16.mxu0 0
        %1200 = vmatpush1.bf16.xpose.msra.mxu0 0
        %1201 = vmatprep.subr.bf16.mxu0 0
        %1202 = vmatpush1.bf16.xpose.msra.mxu0 0
        %1203 = vmatprep.subr.bf16.mxu0 0
        %1204 = vmatpush1.bf16.xpose.msra.mxu0 0
        %1205 = vmatprep.mubr.bf16.mxu0 0
        %1206 = vmatmul.mubr.bf16.gmra.mrb[0].mxu0 %v1168
        %v1207 = vpop.f32.mrb[0].mxu0
        %v1208 = vadd.f32 0.0, %v1207
        %v1209 = vpop.f32.mrb[0].mxu0
        %v1210 = vpop.f32.mrb[0].mxu0
        %v1211 = vpop.f32.mrb[0].mxu0
        %1212 = vdwg.mxu0
        %v1213 = vsel %vm978, %v1208, -inf
        %1214 = vmax.xlane.f32.xlu0 %v1213
        %v1215 = vpop.xlane.xlu0 %1214
        %v1216 = vsub.f32 %v1208, %v1215
        %v1217 = vmul.f32 %v1216, 1.442695
        %v1218 = vpow.pop %v1217
        %v1219 = vsel %vm978, %v1218, 0.0
        %1220 = vadd.xlane.f32.xlu0 %v1219
        %v1221 = vpop.xlane.xlu0 %1220
        %v1222 = vrcp.pop %v1221
        %v1223 = vmul.f32 %v1218, %v1222
        %v1224 = vpack.c.bf16 %v1223, %v1223
        %1225 = vrot.lane.b32.xlu0 %v930, 64
        %v1226 = vpop.permute.xlu0 %1225
        %v1228 = vsel %vm978, %v1224, 0
        %v1231 = vsel %vm994, %v1226, 0
        %1233 = vmatprep.subr.bf16.mxu0 0
        %1234 = vmatpush1.bf16.msra.mxu0 %v1231
        %1235 = vmatprep.subr.bf16.mxu0 0
        %1236 = vmatpush1.bf16.msra.mxu0 0
        %1237 = vmatprep.subr.bf16.mxu0 0
        %1238 = vmatpush1.bf16.msra.mxu0 0
        %1239 = vmatprep.subr.bf16.mxu0 0
        %1240 = vmatpush1.bf16.msra.mxu0 0
        %1241 = vmatprep.subr.bf16.mxu0 0
        %1242 = vmatpush1.bf16.msra.mxu0 0
        %1243 = vmatprep.subr.bf16.mxu0 0
        %1244 = vmatpush1.bf16.msra.mxu0 0
        %1245 = vmatprep.subr.bf16.mxu0 0
        %1246 = vmatpush1.bf16.msra.mxu0 0
        %1247 = vmatprep.subr.bf16.mxu0 0
        %1248 = vmatpush1.bf16.msra.mxu0 0
        %1249 = vmatprep.subr.bf16.mxu0 0
        %1250 = vmatpush1.bf16.msra.mxu0 0
        %1251 = vmatprep.subr.bf16.mxu0 0
        %1252 = vmatpush1.bf16.msra.mxu0 0
        %1253 = vmatprep.subr.bf16.mxu0 0
        %1254 = vmatpush1.bf16.msra.mxu0 0
        %1255 = vmatprep.subr.bf16.mxu0 0
        %1256 = vmatpush1.bf16.msra.mxu0 0
        %1257 = vmatprep.subr.bf16.mxu0 0
        %1258 = vmatpush1.bf16.msra.mxu0 0
        %1259 = vmatprep.subr.bf16.mxu0 0
        %1260 = vmatpush1.bf16.msra.mxu0 0
        %1261 = vmatprep.subr.bf16.mxu0 0
        %1262 = vmatpush1.bf16.msra.mxu0 0
        %1263 = vmatprep.subr.bf16.mxu0 0
        %1264 = vmatpush1.bf16.msra.mxu0 0
        %1265 = vmatprep.mubr.bf16.mxu0 0
        %1266 = vmatmul.mubr.bf16.gmra.mrb[0].mxu0 %v1228
        %v1267 = vpop.f32.mrb[0].mxu0
        %v1268 = vadd.f32 0.0, %v1267
        %v1269 = vpop.f32.mrb[0].mxu0
        %v1270 = vpop.f32.mrb[0].mxu0
        %v1271 = vpop.f32.mrb[0].mxu0
        %1272 = vdwg.mxu0
        %v1273 = vpack.c.bf16 %v1268, %v1268
        %v1275 = vunpack.c.l.b16 %v1273
        %v1276 = vpack.c.b16 %v1275, %v1275
        %1277 = vrot.lane.b32.xlu0 %v1276, 64
        %v1278 = vpop.permute.xlu0 %1277
        %vm1280 = vcmask 781824
        %1281 = vst.msk [vmem:[#allocation2] sm:$0xf] %vm1280, %v1278
        %1282 = vrot.lane.b32.xlu0 %v779, 32
        %v1283 = vpop.permute.xlu0 %1282
        %1284 = vrot.lane.b32.xlu0 %v929, 32
        %v1285 = vpop.permute.xlu0 %1284
        %v1287 = vsel %vm931, %v1283, 0
        %v1290 = vsel %vm931, %v1285, 0
        %1292 = vmatprep.subr.bf16.mxu0 0
        %1293 = vmatpush1.bf16.xpose.msra.mxu0 %v1290
        %1294 = vmatprep.subr.bf16.mxu0 0
        %1295 = vmatpush1.bf16.xpose.msra.mxu0 0
        %1296 = vmatprep.subr.bf16.mxu0 0
        %1297 = vmatpush1.bf16.xpose.msra.mxu0 0
        %1298 = vmatprep.subr.bf16.mxu0 0
        %1299 = vmatpush1.bf16.xpose.msra.mxu0 0
        %1300 = vmatprep.subr.bf16.mxu0 0
        %1301 = vmatpush1.bf16.xpose.msra.mxu0 0
        %1302 = vmatprep.subr.bf16.mxu0 0
        %1303 = vmatpush1.bf16.xpose.msra.mxu0 0
        %1304 = vmatprep.subr.bf16.mxu0 0
        %1305 = vmatpush1.bf16.xpose.msra.mxu0 0
        %1306 = vmatprep.subr.bf16.mxu0 0
        %1307 = vmatpush1.bf16.xpose.msra.mxu0 0
        %1308 = vmatprep.subr.bf16.mxu0 0
        %1309 = vmatpush1.bf16.xpose.msra.mxu0 0
        %1310 = vmatprep.subr.bf16.mxu0 0
        %1311 = vmatpush1.bf16.xpose.msra.mxu0 0
        %1312 = vmatprep.subr.bf16.mxu0 0
        %1313 = vmatpush1.bf16.xpose.msra.mxu0 0
        %1314 = vmatprep.subr.bf16.mxu0 0
        %1315 = vmatpush1.bf16.xpose.msra.mxu0 0
        %1316 = vmatprep.subr.bf16.mxu0 0
        %1317 = vmatpush1.bf16.xpose.msra.mxu0 0
        %1318 = vmatprep.subr.bf16.mxu0 0
        %1319 = vmatpush1.bf16.xpose.msra.mxu0 0
        %1320 = vmatprep.subr.bf16.mxu0 0
        %1321 = vmatpush1.bf16.xpose.msra.mxu0 0
        %1322 = vmatprep.subr.bf16.mxu0 0
        %1323 = vmatpush1.bf16.xpose.msra.mxu0 0
        %1324 = vmatprep.mubr.bf16.mxu0 0
        %1325 = vmatmul.mubr.bf16.gmra.mrb[0].mxu0 %v1287
        %v1326 = vpop.f32.mrb[0].mxu0
        %v1327 = vadd.f32 0.0, %v1326
        %v1328 = vpop.f32.mrb[0].mxu0
        %v1329 = vpop.f32.mrb[0].mxu0
        %v1330 = vpop.f32.mrb[0].mxu0
        %1331 = vdwg.mxu0
        %v1332 = vsel %vm978, %v1327, -inf
        %1333 = vmax.xlane.f32.xlu0 %v1332
        %v1334 = vpop.xlane.xlu0 %1333
        %v1335 = vsub.f32 %v1327, %v1334
        %v1336 = vmul.f32 %v1335, 1.442695
        %v1337 = vpow.pop %v1336
        %v1338 = vsel %vm978, %v1337, 0.0
        %1339 = vadd.xlane.f32.xlu0 %v1338
        %v1340 = vpop.xlane.xlu0 %1339
        %v1341 = vrcp.pop %v1340
        %v1342 = vmul.f32 %v1337, %v1341
        %v1343 = vpack.c.bf16 %v1342, %v1342
        %1344 = vrot.lane.b32.xlu0 %v930, 32
        %v1345 = vpop.permute.xlu0 %1344
        %v1347 = vsel %vm978, %v1343, 0
        %v1350 = vsel %vm994, %v1345, 0
        %1352 = vmatprep.subr.bf16.mxu0 0
        %1353 = vmatpush1.bf16.msra.mxu0 %v1350
        %1354 = vmatprep.subr.bf16.mxu0 0
        %1355 = vmatpush1.bf16.msra.mxu0 0
        %1356 = vmatprep.subr.bf16.mxu0 0
        %1357 = vmatpush1.bf16.msra.mxu0 0
        %1358 = vmatprep.subr.bf16.mxu0 0
        %1359 = vmatpush1.bf16.msra.mxu0 0
        %1360 = vmatprep.subr.bf16.mxu0 0
        %1361 = vmatpush1.bf16.msra.mxu0 0
        %1362 = vmatprep.subr.bf16.mxu0 0
        %1363 = vmatpush1.bf16.msra.mxu0 0
        %1364 = vmatprep.subr.bf16.mxu0 0
        %1365 = vmatpush1.bf16.msra.mxu0 0
        %1366 = vmatprep.subr.bf16.mxu0 0
        %1367 = vmatpush1.bf16.msra.mxu0 0
        %1368 = vmatprep.subr.bf16.mxu0 0
        %1369 = vmatpush1.bf16.msra.mxu0 0
        %1370 = vmatprep.subr.bf16.mxu0 0
        %1371 = vmatpush1.bf16.msra.mxu0 0
        %1372 = vmatprep.subr.bf16.mxu0 0
        %1373 = vmatpush1.bf16.msra.mxu0 0
        %1374 = vmatprep.subr.bf16.mxu0 0
        %1375 = vmatpush1.bf16.msra.mxu0 0
        %1376 = vmatprep.subr.bf16.mxu0 0
        %1377 = vmatpush1.bf16.msra.mxu0 0
        %1378 = vmatprep.subr.bf16.mxu0 0
        %1379 = vmatpush1.bf16.msra.mxu0 0
        %1380 = vmatprep.subr.bf16.mxu0 0
        %1381 = vmatpush1.bf16.msra.mxu0 0
        %1382 = vmatprep.subr.bf16.mxu0 0
        %1383 = vmatpush1.bf16.msra.mxu0 0
        %1384 = vmatprep.mubr.bf16.mxu0 0
        %1385 = vmatmul.mubr.bf16.gmra.mrb[0].mxu0 %v1347
        %v1386 = vpop.f32.mrb[0].mxu0
        %v1387 = vadd.f32 0.0, %v1386
        %v1388 = vpop.f32.mrb[0].mxu0
        %v1389 = vpop.f32.mrb[0].mxu0
        %v1390 = vpop.f32.mrb[0].mxu0
        %1391 = vdwg.mxu0
        %v1392 = vpack.c.bf16 %v1387, %v1387
        %v1394 = vunpack.c.l.b16 %v1392
        %v1395 = vpack.c.b16 %v1394, %v1394
        %1396 = vrot.lane.b32.xlu0 %v1395, 96
        %v1397 = vpop.permute.xlu0 %1396
        %vm1399 = vcmask 1044224
        %1400 = vst.msk [vmem:[#allocation2] sm:$0xf] %vm1399, %v1397
        %v1401 = vld [vmem:[#allocation2] sm:$0xf]
        %v1402 = vld [vmem:[#allocation11] sm:$0xf]
        %v1403 = vld [vmem:[#allocation11 + $0x4] sm:$0xf]
        %v1404 = vld [vmem:[#allocation11 + $0x8] sm:$0xf]
        %v1405 = vld [vmem:[#allocation11 + $0xc] sm:$0xf]
        %v1406 = vld [vmem:[#allocation11 + $0x10] sm:$0xf]
        %v1407 = vld [vmem:[#allocation11 + $0x14] sm:$0xf]
        %v1408 = vld [vmem:[#allocation11 + $0x18] sm:$0xf]
        %v1409 = vld [vmem:[#allocation11 + $0x1c] sm:$0xf]
        %v1410 = vld [vmem:[#allocation11 + $0x20] sm:$0xf]
        %v1411 = vld [vmem:[#allocation11 + $0x24] sm:$0xf]
        %v1412 = vld [vmem:[#allocation11 + $0x28] sm:$0xf]
        %v1413 = vld [vmem:[#allocation11 + $0x2c] sm:$0xf]
        %v1414 = vld [vmem:[#allocation11 + $0x30] sm:$0xf]
        %v1415 = vld [vmem:[#allocation11 + $0x34] sm:$0xf]
        %v1416 = vld [vmem:[#allocation11 + $0x38] sm:$0xf]
        %v1417 = vld [vmem:[#allocation11 + $0x3c] sm:$0xf]
        %v1418 = vld [vmem:[%s7] sm:$0x1]
        %v1420 = vlaneseq
        %v1421 = vshrl.u32 %v1420, 7
        %v1422 = vsub.s32 0, %v1421
        %v1423 = vrot.slane %v1418, %v1422
        %v1441 = vunpack.c.l.b16 %v1402
        %v1442 = vunpack.c.l.b16 %v1403
        %v1443 = vunpack.c.l.b16 %v1404
        %v1444 = vunpack.c.l.b16 %v1405
        %v1445 = vunpack.c.l.b16 %v1406
        %v1446 = vunpack.c.l.b16 %v1407
        %v1447 = vunpack.c.l.b16 %v1408
        %v1448 = vunpack.c.l.b16 %v1409
        %v1449 = vunpack.c.l.b16 %v1410
        %v1450 = vunpack.c.l.b16 %v1411
        %v1451 = vunpack.c.l.b16 %v1412
        %v1452 = vunpack.c.l.b16 %v1413
        %v1453 = vunpack.c.l.b16 %v1414
        %v1454 = vunpack.c.l.b16 %v1415
        %v1455 = vunpack.c.l.b16 %v1416
        %v1456 = vunpack.c.l.b16 %v1417
        %v1457 = vpack.c.b16 %v1442, %v1441
        %v1458 = vpack.c.b16 %v1444, %v1443
        %v1459 = vpack.c.b16 %v1446, %v1445
        %v1460 = vpack.c.b16 %v1448, %v1447
        %v1461 = vpack.c.b16 %v1450, %v1449
        %v1462 = vpack.c.b16 %v1452, %v1451
        %v1463 = vpack.c.b16 %v1454, %v1453
        %v1464 = vpack.c.b16 %v1456, %v1455
        %1473 = vmatprep.subr.bf16.mxu0 0
        %1474 = vmatpush1.bf16.msra.mxu0 %v1457
        %1475 = vmatprep.subr.bf16.mxu0 0
        %1476 = vmatpush1.bf16.msra.mxu0 %v1458
        %1477 = vmatprep.subr.bf16.mxu0 0
        %1478 = vmatpush1.bf16.msra.mxu0 %v1459
        %1479 = vmatprep.subr.bf16.mxu0 0
        %1480 = vmatpush1.bf16.msra.mxu0 %v1460
        %1481 = vmatprep.subr.bf16.mxu0 0
        %1482 = vmatpush1.bf16.msra.mxu0 %v1461
        %1483 = vmatprep.subr.bf16.mxu0 0
        %1484 = vmatpush1.bf16.msra.mxu0 %v1462
        %1485 = vmatprep.subr.bf16.mxu0 0
        %1486 = vmatpush1.bf16.msra.mxu0 %v1463
        %1487 = vmatprep.subr.bf16.mxu0 0
        %1488 = vmatpush1.bf16.msra.mxu0 %v1464
        %1489 = vmatprep.subr.bf16.mxu0 0
        %1490 = vmatpush1.bf16.msra.mxu0 0
        %1491 = vmatprep.subr.bf16.mxu0 0
        %1492 = vmatpush1.bf16.msra.mxu0 0
        %1493 = vmatprep.subr.bf16.mxu0 0
        %1494 = vmatpush1.bf16.msra.mxu0 0
        %1495 = vmatprep.subr.bf16.mxu0 0
        %1496 = vmatpush1.bf16.msra.mxu0 0
        %1497 = vmatprep.subr.bf16.mxu0 0
        %1498 = vmatpush1.bf16.msra.mxu0 0
        %1499 = vmatprep.subr.bf16.mxu0 0
        %1500 = vmatpush1.bf16.msra.mxu0 0
        %1501 = vmatprep.subr.bf16.mxu0 0
        %1502 = vmatpush1.bf16.msra.mxu0 0
        %1503 = vmatprep.subr.bf16.mxu0 0
        %1504 = vmatpush1.bf16.msra.mxu0 0
        %1505 = vmatprep.mubr.bf16.mxu0 0
        %1506 = vmatmul.mubr.bf16.gmra.mrb[0].mxu0 %v1401
        %v1507 = vpop.f32.mrb[0].mxu0
        %v1508 = vadd.f32 %v1423, %v1507
        %v1509 = vpop.f32.mrb[0].mxu0
        %v1510 = vpop.f32.mrb[0].mxu0
        %v1511 = vpop.f32.mrb[0].mxu0
        %1512 = vdwg.mxu0
        %v1513 = vadd.f32 %v664, %v1508
        %1514 = vadd.xlane.f32.xlu0 %v1513
        %v1515 = vpop.xlane.xlu0 %1514
        %v1516 = vrcp.pop 128.0
        %v1517 = vmul.f32 %v1515, %v1516
        %v1518 = vsub.f32 %v1513, %v1517
        %v1519 = vmul.f32 %v1518, %v1518
        %1520 = vadd.xlane.f32.xlu0 %v1519
        %v1521 = vpop.xlane.xlu0 %1520
        %v1522 = vmul.f32 %v1521, %v1516
        %v1523 = vadd.f32 %v1522, 1e-05
        %v1524 = vrsqrt.pop %v1523
        %v1525 = vld [vmem:[%s12] sm:$0x1]
        %v1527 = vlaneseq
        %v1528 = vshrl.u32 %v1527, 7
        %v1529 = vsub.s32 0, %v1528
        %v1530 = vrot.slane %v1525, %v1529
        %v1532 = vmul.f32 %v1524, %v1530
        %v1533 = vmul.f32 %v1518, %v1532
        %v1534 = vld [vmem:[%s13] sm:$0x1]
        %v1536 = vlaneseq
        %v1537 = vshrl.u32 %v1536, 7
        %v1538 = vsub.s32 0, %v1537
        %v1539 = vrot.slane %v1534, %v1538
        %v1541 = vadd.f32 %v1533, %v1539
        %v1542 = vpack.c.bf16 %v1541, %v1541
        %v1543 = vld [vmem:[%s11] sm:$0x1]
        %v1545 = vlaneseq
        %v1546 = vshrl.u32 %v1545, 7
        %v1547 = vsub.s32 0, %v1546
        %v1548 = vrot.slane %v1543, %v1547
        %v1550 = vld [vmem:[#allocation12] sm:$0xff]
        %v1551 = vld [vmem:[#allocation12 + $0x8] sm:$0xff]
        %v1552 = vld [vmem:[#allocation12 + $0x10] sm:$0xff]
        %v1553 = vld [vmem:[#allocation12 + $0x18] sm:$0xff]
        %v1554 = vld [vmem:[#allocation12 + $0x20] sm:$0xff]
        %v1555 = vld [vmem:[#allocation12 + $0x28] sm:$0xff]
        %v1556 = vld [vmem:[#allocation12 + $0x30] sm:$0xff]
        %v1557 = vld [vmem:[#allocation12 + $0x38] sm:$0xff]
        %v1558 = vld [vmem:[#allocation12 + $0x40] sm:$0xff]
        %v1559 = vld [vmem:[#allocation12 + $0x48] sm:$0xff]
        %v1560 = vld [vmem:[#allocation12 + $0x50] sm:$0xff]
        %v1561 = vld [vmem:[#allocation12 + $0x58] sm:$0xff]
        %v1562 = vld [vmem:[#allocation12 + $0x60] sm:$0xff]
        %v1563 = vld [vmem:[#allocation12 + $0x68] sm:$0xff]
        %v1564 = vld [vmem:[#allocation12 + $0x70] sm:$0xff]
        %v1565 = vld [vmem:[#allocation12 + $0x78] sm:$0xff]
        %v1566 = vld [vmem:[%s9] sm:$0x3]
        %v1568 = vlaneseq
        %v1569 = vshrl.u32 %v1568, 7
        %v1570 = vsub.s32 0, %v1569
        %v1571 = vrot.slane %v1566, %v1570
        %v1572 = vlaneseq
        %v1573 = vshrl.u32 %v1572, 7
        %v1574 = vsub.s32 1, %v1573
        %v1575 = vrot.slane %v1566, %v1574
        %v1594 = vunpack.c.l.b16 %v1550
        %v1595 = vunpack.c.h.b16 %v1550
        %v1596 = vunpack.c.l.b16 %v1551
        %v1597 = vunpack.c.h.b16 %v1551
        %v1598 = vunpack.c.l.b16 %v1552
        %v1599 = vunpack.c.h.b16 %v1552
        %v1600 = vunpack.c.l.b16 %v1553
        %v1601 = vunpack.c.h.b16 %v1553
        %v1602 = vunpack.c.l.b16 %v1554
        %v1603 = vunpack.c.h.b16 %v1554
        %v1604 = vunpack.c.l.b16 %v1555
        %v1605 = vunpack.c.h.b16 %v1555
        %v1606 = vunpack.c.l.b16 %v1556
        %v1607 = vunpack.c.h.b16 %v1556
        %v1608 = vunpack.c.l.b16 %v1557
        %v1609 = vunpack.c.h.b16 %v1557
        %v1610 = vunpack.c.l.b16 %v1558
        %v1611 = vunpack.c.h.b16 %v1558
        %v1612 = vunpack.c.l.b16 %v1559
        %v1613 = vunpack.c.h.b16 %v1559
        %v1614 = vunpack.c.l.b16 %v1560
        %v1615 = vunpack.c.h.b16 %v1560
        %v1616 = vunpack.c.l.b16 %v1561
        %v1617 = vunpack.c.h.b16 %v1561
        %v1618 = vunpack.c.l.b16 %v1562
        %v1619 = vunpack.c.h.b16 %v1562
        %v1620 = vunpack.c.l.b16 %v1563
        %v1621 = vunpack.c.h.b16 %v1563
        %v1622 = vunpack.c.l.b16 %v1564
        %v1623 = vunpack.c.h.b16 %v1564
        %v1624 = vunpack.c.l.b16 %v1565
        %v1625 = vunpack.c.h.b16 %v1565
        %v1626 = vpack.c.b16 %v1596, %v1594
        %v1627 = vpack.c.b16 %v1597, %v1595
        %v1628 = vpack.c.b16 %v1600, %v1598
        %v1629 = vpack.c.b16 %v1601, %v1599
        %v1630 = vpack.c.b16 %v1604, %v1602
        %v1631 = vpack.c.b16 %v1605, %v1603
        %v1632 = vpack.c.b16 %v1608, %v1606
        %v1633 = vpack.c.b16 %v1609, %v1607
        %v1634 = vpack.c.b16 %v1612, %v1610
        %v1635 = vpack.c.b16 %v1613, %v1611
        %v1636 = vpack.c.b16 %v1616, %v1614
        %v1637 = vpack.c.b16 %v1617, %v1615
        %v1638 = vpack.c.b16 %v1620, %v1618
        %v1639 = vpack.c.b16 %v1621, %v1619
        %v1640 = vpack.c.b16 %v1624, %v1622
        %v1641 = vpack.c.b16 %v1625, %v1623
        %1658 = vmatprep.subr.bf16.mxu0 %v1627
        %1659 = vmatpush1.bf16.msra.mxu0 %v1626
        %1660 = vmatprep.subr.bf16.mxu0 %v1629
        %1661 = vmatpush1.bf16.msra.mxu0 %v1628
        %1662 = vmatprep.subr.bf16.mxu0 %v1631
        %1663 = vmatpush1.bf16.msra.mxu0 %v1630
        %1664 = vmatprep.subr.bf16.mxu0 %v1633
        %1665 = vmatpush1.bf16.msra.mxu0 %v1632
        %1666 = vmatprep.subr.bf16.mxu0 %v1635
        %1667 = vmatpush1.bf16.msra.mxu0 %v1634
        %1668 = vmatprep.subr.bf16.mxu0 %v1637
        %1669 = vmatpush1.bf16.msra.mxu0 %v1636
        %1670 = vmatprep.subr.bf16.mxu0 %v1639
        %1671 = vmatpush1.bf16.msra.mxu0 %v1638
        %1672 = vmatprep.subr.bf16.mxu0 %v1641
        %1673 = vmatpush1.bf16.msra.mxu0 %v1640
        %1674 = vmatprep.subr.bf16.mxu0 0
        %1675 = vmatpush1.bf16.msra.mxu0 0
        %1676 = vmatprep.subr.bf16.mxu0 0
        %1677 = vmatpush1.bf16.msra.mxu0 0
        %1678 = vmatprep.subr.bf16.mxu0 0
        %1679 = vmatpush1.bf16.msra.mxu0 0
        %1680 = vmatprep.subr.bf16.mxu0 0
        %1681 = vmatpush1.bf16.msra.mxu0 0
        %1682 = vmatprep.subr.bf16.mxu0 0
        %1683 = vmatpush1.bf16.msra.mxu0 0
        %1684 = vmatprep.subr.bf16.mxu0 0
        %1685 = vmatpush1.bf16.msra.mxu0 0
        %1686 = vmatprep.subr.bf16.mxu0 0
        %1687 = vmatpush1.bf16.msra.mxu0 0
        %1688 = vmatprep.subr.bf16.mxu0 0
        %1689 = vmatpush1.bf16.msra.mxu0 0
        %1690 = vmatprep.mubr.bf16.mxu0 0
        %1691 = vmatmul.mubr.bf16.gmra.mrb[0].mxu0 %v1542
        %v1692 = vpop.f32.mrb[0].mxu0
        %v1693 = vadd.f32 %v1571, %v1692
        %v1694 = vpop.f32.mrb[0].mxu0
        %v1695 = vadd.f32 %v1575, %v1694
        %v1696 = vpop.f32.mrb[0].mxu0
        %v1697 = vpop.f32.mrb[0].mxu0
        %1698 = vdwg.mxu0
        %v1699 = vmax.f32 %v1693, 0.0
        %v1700 = vmax.f32 %v1695, 0.0
        %v1701 = vpack.c.bf16 %v1699, %v1699
        %v1702 = vpack.c.bf16 %v1700, %v1700
        %v1703 = vld [vmem:[#allocation14] sm:$0xf]
        %v1704 = vld [vmem:[#allocation14 + $0x4] sm:$0xf]
        %v1705 = vld [vmem:[#allocation14 + $0x8] sm:$0xf]
        %v1706 = vld [vmem:[#allocation14 + $0xc] sm:$0xf]
        %v1707 = vld [vmem:[#allocation14 + $0x10] sm:$0xf]
        %v1708 = vld [vmem:[#allocation14 + $0x14] sm:$0xf]
        %v1709 = vld [vmem:[#allocation14 + $0x18] sm:$0xf]
        %v1710 = vld [vmem:[#allocation14 + $0x1c] sm:$0xf]
        %v1711 = vld [vmem:[#allocation14 + $0x20] sm:$0xf]
        %v1712 = vld [vmem:[#allocation14 + $0x24] sm:$0xf]
        %v1713 = vld [vmem:[#allocation14 + $0x28] sm:$0xf]
        %v1714 = vld [vmem:[#allocation14 + $0x2c] sm:$0xf]
        %v1715 = vld [vmem:[#allocation14 + $0x30] sm:$0xf]
        %v1716 = vld [vmem:[#allocation14 + $0x34] sm:$0xf]
        %v1717 = vld [vmem:[#allocation14 + $0x38] sm:$0xf]
        %v1718 = vld [vmem:[#allocation14 + $0x3c] sm:$0xf]
        %v1719 = vld [vmem:[#allocation14 + $0x40] sm:$0xf]
        %v1720 = vld [vmem:[#allocation14 + $0x44] sm:$0xf]
        %v1721 = vld [vmem:[#allocation14 + $0x48] sm:$0xf]
        %v1722 = vld [vmem:[#allocation14 + $0x4c] sm:$0xf]
        %v1723 = vld [vmem:[#allocation14 + $0x50] sm:$0xf]
        %v1724 = vld [vmem:[#allocation14 + $0x54] sm:$0xf]
        %v1725 = vld [vmem:[#allocation14 + $0x58] sm:$0xf]
        %v1726 = vld [vmem:[#allocation14 + $0x5c] sm:$0xf]
        %v1727 = vld [vmem:[#allocation14 + $0x60] sm:$0xf]
        %v1728 = vld [vmem:[#allocation14 + $0x64] sm:$0xf]
        %v1729 = vld [vmem:[#allocation14 + $0x68] sm:$0xf]
        %v1730 = vld [vmem:[#allocation14 + $0x6c] sm:$0xf]
        %v1731 = vld [vmem:[#allocation14 + $0x70] sm:$0xf]
        %v1732 = vld [vmem:[#allocation14 + $0x74] sm:$0xf]
        %v1733 = vld [vmem:[#allocation14 + $0x78] sm:$0xf]
        %v1734 = vld [vmem:[#allocation14 + $0x7c] sm:$0xf]
        %v1767 = vunpack.c.l.b16 %v1703
        %v1768 = vunpack.c.l.b16 %v1704
        %v1769 = vunpack.c.l.b16 %v1705
        %v1770 = vunpack.c.l.b16 %v1706
        %v1771 = vunpack.c.l.b16 %v1707
        %v1772 = vunpack.c.l.b16 %v1708
        %v1773 = vunpack.c.l.b16 %v1709
        %v1774 = vunpack.c.l.b16 %v1710
        %v1775 = vunpack.c.l.b16 %v1711
        %v1776 = vunpack.c.l.b16 %v1712
        %v1777 = vunpack.c.l.b16 %v1713
        %v1778 = vunpack.c.l.b16 %v1714
        %v1779 = vunpack.c.l.b16 %v1715
        %v1780 = vunpack.c.l.b16 %v1716
        %v1781 = vunpack.c.l.b16 %v1717
        %v1782 = vunpack.c.l.b16 %v1718
        %v1783 = vunpack.c.l.b16 %v1719
        %v1784 = vunpack.c.l.b16 %v1720
        %v1785 = vunpack.c.l.b16 %v1721
        %v1786 = vunpack.c.l.b16 %v1722
        %v1787 = vunpack.c.l.b16 %v1723
        %v1788 = vunpack.c.l.b16 %v1724
        %v1789 = vunpack.c.l.b16 %v1725
        %v1790 = vunpack.c.l.b16 %v1726
        %v1791 = vunpack.c.l.b16 %v1727
        %v1792 = vunpack.c.l.b16 %v1728
        %v1793 = vunpack.c.l.b16 %v1729
        %v1794 = vunpack.c.l.b16 %v1730
        %v1795 = vunpack.c.l.b16 %v1731
        %v1796 = vunpack.c.l.b16 %v1732
        %v1797 = vunpack.c.l.b16 %v1733
        %v1798 = vunpack.c.l.b16 %v1734
        %v1799 = vpack.c.b16 %v1768, %v1767
        %v1800 = vpack.c.b16 %v1770, %v1769
        %v1801 = vpack.c.b16 %v1772, %v1771
        %v1802 = vpack.c.b16 %v1774, %v1773
        %v1803 = vpack.c.b16 %v1776, %v1775
        %v1804 = vpack.c.b16 %v1778, %v1777
        %v1805 = vpack.c.b16 %v1780, %v1779
        %v1806 = vpack.c.b16 %v1782, %v1781
        %v1807 = vpack.c.b16 %v1784, %v1783
        %v1808 = vpack.c.b16 %v1786, %v1785
        %v1809 = vpack.c.b16 %v1788, %v1787
        %v1810 = vpack.c.b16 %v1790, %v1789
        %v1811 = vpack.c.b16 %v1792, %v1791
        %v1812 = vpack.c.b16 %v1794, %v1793
        %v1813 = vpack.c.b16 %v1796, %v1795
        %v1814 = vpack.c.b16 %v1798, %v1797
        %1831 = vmatprep.subr.bf16.mxu0 0
        %1832 = vmatpush1.bf16.msra.mxu0 %v1799
        %1833 = vmatprep.subr.bf16.mxu0 0
        %1834 = vmatpush1.bf16.msra.mxu0 %v1800
        %1835 = vmatprep.subr.bf16.mxu0 0
        %1836 = vmatpush1.bf16.msra.mxu0 %v1801
        %1837 = vmatprep.subr.bf16.mxu0 0
        %1838 = vmatpush1.bf16.msra.mxu0 %v1802
        %1839 = vmatprep.subr.bf16.mxu0 0
        %1840 = vmatpush1.bf16.msra.mxu0 %v1803
        %1841 = vmatprep.subr.bf16.mxu0 0
        %1842 = vmatpush1.bf16.msra.mxu0 %v1804
        %1843 = vmatprep.subr.bf16.mxu0 0
        %1844 = vmatpush1.bf16.msra.mxu0 %v1805
        %1845 = vmatprep.subr.bf16.mxu0 0
        %1846 = vmatpush1.bf16.msra.mxu0 %v1806
        %1847 = vmatprep.subr.bf16.mxu0 0
        %1848 = vmatpush1.bf16.msra.mxu0 %v1807
        %1849 = vmatprep.subr.bf16.mxu0 0
        %1850 = vmatpush1.bf16.msra.mxu0 %v1808
        %1851 = vmatprep.subr.bf16.mxu0 0
        %1852 = vmatpush1.bf16.msra.mxu0 %v1809
        %1853 = vmatprep.subr.bf16.mxu0 0
        %1854 = vmatpush1.bf16.msra.mxu0 %v1810
        %1855 = vmatprep.subr.bf16.mxu0 0
        %1856 = vmatpush1.bf16.msra.mxu0 %v1811
        %1857 = vmatprep.subr.bf16.mxu0 0
        %1858 = vmatpush1.bf16.msra.mxu0 %v1812
        %1859 = vmatprep.subr.bf16.mxu0 0
        %1860 = vmatpush1.bf16.msra.mxu0 %v1813
        %1861 = vmatprep.subr.bf16.mxu0 0
        %1862 = vmatpush1.bf16.msra.mxu0 %v1814
        %1863 = vmatprep.mubr.bf16.mxu0 %v1702
        %1864 = vmatmul.mubr.bf16.gmra.mrb[0].mxu0 %v1701
        %v1865 = vpop.f32.mrb[0].mxu0
        %v1866 = vadd.f32 0.0, %v1865
        %v1867 = vpop.f32.mrb[0].mxu0
        %v1868 = vpop.f32.mrb[0].mxu0
        %v1869 = vpop.f32.mrb[0].mxu0
        %1870 = vdwg.mxu0
        %v1871 = vadd.f32 %v1548, %v1866
        %v1872 = vadd.f32 %v1541, %v1871
        %1873 = vadd.xlane.f32.xlu0 %v1872
        %v1874 = vpop.xlane.xlu0 %1873
        %v1875 = vmul.f32 %v1874, %v1516
        %v1876 = vsub.f32 %v1872, %v1875
        %v1877 = vmul.f32 %v1876, %v1876
        %1878 = vadd.xlane.f32.xlu0 %v1877
        %v1879 = vpop.xlane.xlu0 %1878
        %v1880 = vmul.f32 %v1879, %v1516
        %v1881 = vadd.f32 %v1880, 1e-05
        %v1882 = vrsqrt.pop %v1881
        %v1883 = vld [vmem:[%s14] sm:$0x1]
        %v1885 = vlaneseq
        %v1886 = vshrl.u32 %v1885, 7
        %v1887 = vsub.s32 0, %v1886
        %v1888 = vrot.slane %v1883, %v1887
        %v1890 = vmul.f32 %v1882, %v1888
        %v1891 = vmul.f32 %v1876, %v1890
        %v1892 = vld [vmem:[%s15] sm:$0x1]
        %v1894 = vlaneseq
        %v1895 = vshrl.u32 %v1894, 7
        %v1896 = vsub.s32 0, %v1895
        %v1897 = vrot.slane %v1892, %v1896
        %v1899 = vadd.f32 %v1891, %v1897
        %1900 = vst [vmem:[%s662] sm:$0xff] %v1899
        %s1901 = sand.u32 %s408, 1
        %s1902 = scalar_lea.sflag [#allocation5], %s1901
        %s1903 = sand.u32 %s408, 1
        %s1904 = smul.addr %s1903, 8
        %s1905 = scalar_lea.vmem [#allocation15], %s1904
        // Predicated region
        $region113: #{tpu_custom_call.1} parent=83 // pred_check
          %p1906 = pneg %p418
        $region114: #{tpu_custom_call.1} parent=83 // pred_check_branch
          %1908 = sbr.rel (%p1906) target = $region116
        $region115: #{tpu_custom_call.1} parent=83 // pred_region
          %s1910 = ssub.s32 128, 128
          %1911 = vsyncadd %s1902, %s1910
          %s1912 = sadd.s32 %s43, %s42
          %s1913 = smul.addr %s1912, 128
          %s1914 = scalar_lea.hbm %s16, %s1913
          %s1916 = sshll.u32 %s1905, 4
          %s1917 = int_to_ptr.vmem [resolvable:$true] %s1916
          %1919 = dma.vmem_to_hbm [thread:$0]  %s1917, 128, %s1914, %s1902
        $region116: #{tpu_custom_call.1} parent=83 // pred_fallthru
          _
      $region84: #{tpu_custom_call.1} parent=5 // pred_fallthru
        _
      %p1920 = scmp.le.s32.totalorder 2, %s33
      // Predicated region
      $region117: #{tpu_custom_call.1} parent=5 // pred_check
        %p1921 = pneg %p1920
      $region118: #{tpu_custom_call.1} parent=5 // pred_check_branch
        %1923 = sbr.rel (%p1921) target = $region120
      $region119: #{tpu_custom_call.1} parent=5 // pred_region
        %s1924 = ssub.s32 %s33, 2
        // Predicated region
        $region121: #{tpu_custom_call.1} parent=119 // pred_check
          %p1925 = pneg %p424
        $region122: #{tpu_custom_call.1} parent=119 // pred_check_branch
          %1927 = sbr.rel (%p1925) target = $region124
        $region123: #{tpu_custom_call.1} parent=119 // pred_region
          %s1928 = sand.u32 %s409, 1
          %s1929 = scalar_lea.sflag [#allocation5], %s1928
          %s1930 = sand.u32 %s409, 1
          %s1931 = smul.addr %s1930, 8
          %s1932 = scalar_lea.vmem [#allocation15], %s1931
          %1933 = dma.done %s1929, 128
        $region124: #{tpu_custom_call.1} parent=119 // pred_fallthru
          _
      $region120: #{tpu_custom_call.1} parent=5 // pred_fallthru
        _
    $region6: #{tpu_custom_call.1} parent=1 // loop_footer
      %s37 = sadd.s32 1, %s33
    $region7: #{tpu_custom_call.1} parent=1 // loop_footer_branch
      %32 = sbr.rel target = $region3
    $region8: #{tpu_custom_call.1} parent=1 // loop_exit
      _
    %1934 = vsyncpa [#allocation4], 1
    %s1935 = scalar_lea.sflag [#allocation4], 1
    %1936 = vsyncpa %s1935, 1
    %1937 = vsyncpa [#allocation7], 1
    %s1938 = scalar_lea.sflag [#allocation7], 1
    %1939 = vsyncpa %s1938, 1
    %1940 = vsyncpa [#allocation10], 1
    %1941 = vsyncpa [#allocation13], 1
    %1942 = vsyncpa [#allocation5], 1
    %s1943 = scalar_lea.sflag [#allocation5], 1
    %1944 = vsyncpa %s1943, 1

</llo_original>
